<compile_context>
chip_gen: v7x
topology: tpu7x:2x2x1
jax: 0.10.0
libtpu: 0.0.40
codegen_flags: <defaults>
</compile_context>

<pallas_src>
import jax
import jax.numpy as jnp
from jax import lax
from jax.experimental import pallas as pl
from jax.experimental.pallas import tpu as pltpu


def lstm_fc_kernel(gx_ref, w_hh_ref, w_fc_ref, b_fc_ref, out_ref, h_scr, c_scr):
    """One time-chunk of the LSTM recurrence; h/c carried in VMEM scratch.

    gx_ref   : (TC, B, 4*HP)  precomputed x @ W_ih^T + b, time-major, gate-padded
    w_hh_ref : (HP, 4*HP)     hidden->hidden weights, padded + transposed
    w_fc_ref : (1, HP)        fc weight row, padded
    b_fc_ref : (1, 1) SMEM    fc bias scalar
    out_ref  : (B, 1)         fc(h_T), written only on the last grid step
    h_scr    : (B, HP)        hidden state carried across grid steps
    c_scr    : (B, HP)        cell state carried across grid steps
    """
    tc = gx_ref.shape[0]
    HP = h_scr.shape[1]

    @pl.when(pl.program_id(0) == 0)
    def _init():
        h_scr[...] = jnp.zeros_like(h_scr)
        c_scr[...] = jnp.zeros_like(c_scr)

    def step(t, carry):
        h, c = carry
        # One MXU matmul per step (input projection + bias already folded into gx).
        # w_hh is deliberately re-loaded from VMEM here rather than hoisted: holding
        # the full (128, 512) f32 block live across the unrolled loop would consume
        # all 64 vregs and force spills on the serial critical path.
        gates = (
            jnp.dot(h, w_hh_ref[...], preferred_element_type=jnp.float32)
            + gx_ref[t]
        )
        # Lane-aligned full-vreg gate slices (HP = 128) -> no XLU relayouts.
        i = jax.nn.sigmoid(gates[:, 0:HP])
        f = jax.nn.sigmoid(gates[:, HP:2 * HP])
        g = jnp.tanh(gates[:, 2 * HP:3 * HP])
        o = jax.nn.sigmoid(gates[:, 3 * HP:4 * HP])
        c_new = f * c + i * g
        h_new = o * jnp.tanh(c_new)
        return h_new, c_new

    # Short, static trip count: fully unroll so the LLO scheduler can overlap the
    # MXU push of step t+1 with the VPU/EUP gate math of step t.
    h, c = lax.fori_loop(0, tc, step, (h_scr[...], c_scr[...]), unroll=True)
    h_scr[...] = h
    c_scr[...] = c

    @pl.when(pl.program_id(0) == pl.num_programs(0) - 1)
    def _finalize():
        # Final FC as VPU multiply + XLU lane reduction (padded lanes of h and
        # w_fc are exactly zero, so they do not contribute).
        fc = jnp.sum(h * w_fc_ref[...], axis=-1, keepdims=True)
        out_ref[...] = fc + b_fc_ref[0, 0]


def _pad_gate_cols(a, H, HP):
    """(..., 4H) -> (..., 4*HP): gate k moved to columns [k*HP, k*HP+H), zeros elsewhere."""
    if HP == H:
        return a
    pad = [(0, 0)] * (a.ndim - 1) + [(0, HP - H)]
    parts = [jnp.pad(a[..., k * H:(k + 1) * H], pad) for k in range(4)]
    return jnp.concatenate(parts, axis=-1)


def lstm_model_forward(x, params, *, t_chunk=None):
    """x: (B, T, F) float32, batch_first (PyTorch convention). Returns (B, 1)."""
    B, T, F = x.shape
    H = params["w_hh_t"].shape[0]
    HP = max(128, ((H + 127) // 128) * 128)  # lane-aligned per-gate width

    # --- one-time weight re-layout (pure JAX, outside the kernel) ---------------
    w_ih_p = _pad_gate_cols(params["w_ih_t"], H, HP)                  # (F, 4*HP)
    b_p = _pad_gate_cols(params["b"], H, HP)                          # (1, 4*HP)
    w_hh_p = _pad_gate_cols(params["w_hh_t"], H, HP)                  # (H, 4*HP)
    w_hh_p = jnp.pad(w_hh_p, ((0, HP - H), (0, 0)))                   # (HP, 4*HP)
    w_fc_row = jnp.pad(params["w_fc_t"].reshape(1, H),
                       ((0, 0), (0, HP - H)))                         # (1, HP)
    b_fc = params["b_fc"].reshape(1, 1)                               # (1, 1)

    # --- hoisted input projection: one batched matmul over all timesteps --------
    # (also produces the time-major layout directly; no raw-x transpose pass)
    gx = jnp.einsum("btf,fg->tbg", x, w_ih_p) + b_p                   # (T, B, 4*HP)

    # --- grid: single kernel invocation unless gx is too big for VMEM -----------
    if t_chunk is None:
        gx_bytes = T * B * 4 * HP * 4
        t_chunk = T if gx_bytes <= 8 * 1024 * 1024 else 128
    if T % t_chunk != 0:
        t_chunk = T
    num_chunks = T // t_chunk
    grid = (num_chunks,)

    if num_chunks > 1:
        # Invariant blocks: no need to double-buffer across grid steps.
        w_hh_spec = pl.BlockSpec((HP, 4 * HP), lambda t: (0, 0),
                                 pipeline_mode=pl.Buffered(1))
        w_fc_spec = pl.BlockSpec((1, HP), lambda t: (0, 0),
                                 pipeline_mode=pl.Buffered(1))
    else:
        w_hh_spec = pl.BlockSpec((HP, 4 * HP), lambda t: (0, 0))
        w_fc_spec = pl.BlockSpec((1, HP), lambda t: (0, 0))

    return pl.pallas_call(
        lstm_fc_kernel,
        out_shape=jax.ShapeDtypeStruct((B, 1), jnp.float32),
        grid_spec=pltpu.PrefetchScalarGridSpec(
            num_scalar_prefetch=0,
            grid=grid,
            in_specs=[
                pl.BlockSpec((t_chunk, B, 4 * HP), lambda t: (t, 0, 0)),
                w_hh_spec,
                w_fc_spec,
                pl.BlockSpec(memory_space=pltpu.MemorySpace.SMEM),   # b_fc scalar
            ],
            out_specs=pl.BlockSpec((B, 1), lambda t: (0, 0)),
            scratch_shapes=[
                pltpu.VMEM((B, HP), jnp.float32),  # h carry
                pltpu.VMEM((B, HP), jnp.float32),  # c carry
            ],
        ),
        compiler_params=pltpu.CompilerParams(
            dimension_semantics=("arbitrary",),        # sequential recurrence axis
            vmem_limit_bytes=32 * 1024 * 1024,         # explicit, v7x-safe budget
        ),
    )(gx, w_hh_p, w_fc_row, b_fc)


def init_params(num_features=14, hidden_size=64, seed=42):
    """Deterministic init mirroring nn.LSTM / nn.Linear shapes (uniform +-1/sqrt(H))."""
    H, F = hidden_size, num_features
    k = 1.0 / jnp.sqrt(jnp.float32(H))
    keys = jax.random.split(jax.random.PRNGKey(seed), 6)
    w_ih = jax.random.uniform(keys[0], (4 * H, F), jnp.float32, -k, k)   # weight_ih_l0
    w_hh = jax.random.uniform(keys[1], (4 * H, H), jnp.float32, -k, k)   # weight_hh_l0
    b_ih = jax.random.uniform(keys[2], (4 * H,), jnp.float32, -k, k)     # bias_ih_l0
    b_hh = jax.random.uniform(keys[3], (4 * H,), jnp.float32, -k, k)     # bias_hh_l0
    w_fc = jax.random.uniform(keys[4], (1, H), jnp.float32, -k, k)       # fc.weight
    b_fc = jax.random.uniform(keys[5], (1,), jnp.float32, -k, k)         # fc.bias
    return {
        "w_ih_t": w_ih.T,                         # (F, 4H)
        "w_hh_t": w_hh.T,                         # (H, 4H)
        "b": (b_ih + b_hh).reshape(1, 4 * H),     # (1, 4H)
        "w_fc_t": w_fc.T,                         # (H, 1)
        "b_fc": b_fc.reshape(1, 1),               # (1, 1)
    }


def reference_forward(x, params):
    """Pure-JAX reference of the same math (PyTorch LSTM gate order i,f,g,o)."""
    B, T, F = x.shape
    H = params["w_hh_t"].shape[0]
    h = jnp.zeros((B, H), jnp.float32)
    c = jnp.zeros((B, H), jnp.float32)
    for t in range(T):
        gates = x[:, t, :] @ params["w_ih_t"] + h @ params["w_hh_t"] + params["b"]
        i = jax.nn.sigmoid(gates[:, 0:H])
        f = jax.nn.sigmoid(gates[:, H:2 * H])
        g = jnp.tanh(gates[:, 2 * H:3 * H])
        o = jax.nn.sigmoid(gates[:, 3 * H:4 * H])
        c = f * c + i * g
        h = o * jnp.tanh(c)
    return h @ params["w_fc_t"] + params["b_fc"]


if __name__ == "__main__":
    B, T, F, H = 2, 8, 14, 64
    x = jax.random.normal(jax.random.PRNGKey(0), (B, T, F), jnp.float32)
    params = init_params(num_features=F, hidden_size=H, seed=42)

    out = lstm_model_forward(x, params)          # single-grid-step fast path
    out = jax.block_until_ready(out)

    ref = reference_forward(x, params)
    assert out.shape == (B, 1)
    assert jnp.allclose(out, ref, atol=1e-4, rtol=1e-4)
    print("KERNEL_OK")
</pallas_src>

<mosaic_0001>
module attributes {stable_mosaic.version = 11 : i64} {
  func.func @lstm_fc_kernel(%arg0: i32, %arg1: memref<8x2x512xf32, #tpu.memory_space<vmem>>, %arg2: memref<128x512xf32, #tpu.memory_space<vmem>>, %arg3: memref<1x128xf32, #tpu.memory_space<vmem>>, %arg4: memref<1x1xf32, #tpu.memory_space<smem>>, %arg5: memref<2x1xf32, #tpu.memory_space<vmem>>, %arg6: memref<2x128xf32, #tpu.memory_space<vmem>>, %arg7: memref<2x128xf32, #tpu.memory_space<vmem>>) attributes {dimension_semantics = [#tpu.dimension_semantics<arbitrary>], iteration_bounds = array<i64: 1>, scalar_prefetch = 0 : i64, scratch_operands = 2 : i64, tpu.core_type = #tpu.core_type<tc>, window_params = [{transform_indices = @transform_0, window_bounds = array<i64: 8, 2, 512>}, {pipeline_mode = #tpu.pipeline_mode<synchronous>, transform_indices = @transform_1, window_bounds = array<i64: 128, 512>}, {pipeline_mode = #tpu.pipeline_mode<synchronous>, transform_indices = @transform_2, window_bounds = array<i64: 1, 128>}, {transform_indices = @transform_3, window_bounds = array<i64: 1, 1>}, {pipeline_mode = #tpu.pipeline_mode<synchronous>, transform_indices = @transform_4, window_bounds = array<i64: 2, 1>}]} {
    %c0_i32 = arith.constant 0 : i32
    %0 = arith.cmpi eq, %arg0, %c0_i32 : i32
    %1 = arith.extui %0 : i1 to i32
    %c0_i32_0 = arith.constant 0 : i32
    %2 = arith.cmpi ne, %1, %c0_i32_0 : i32
    scf.if %2 {
      %cst_74 = arith.constant 0.000000e+00 : f32
      %258 = vector.broadcast %cst_74 : f32 to vector<2x128xf32>
      %c0_75 = arith.constant 0 : index
      %c0_76 = arith.constant 0 : index
      %259 = vector.load %arg6[%c0_75, %c0_76] : memref<2x128xf32, #tpu.memory_space<vmem>>, vector<2x128xf32>
      tpu.vector_store %arg6[%c0_75, %c0_76], %258 {strides = array<i32>} : memref<2x128xf32, #tpu.memory_space<vmem>>, vector<2x128xf32>,
      %cst_77 = arith.constant 0.000000e+00 : f32
      %260 = vector.broadcast %cst_77 : f32 to vector<2x128xf32>
      %c0_78 = arith.constant 0 : index
      %c0_79 = arith.constant 0 : index
      %261 = vector.load %arg7[%c0_78, %c0_79] : memref<2x128xf32, #tpu.memory_space<vmem>>, vector<2x128xf32>
      tpu.vector_store %arg7[%c0_78, %c0_79], %260 {strides = array<i32>} : memref<2x128xf32, #tpu.memory_space<vmem>>, vector<2x128xf32>,
    } else {
    }
    %c0 = arith.constant 0 : index
    %c0_1 = arith.constant 0 : index
    %3 = vector.load %arg6[%c0, %c0_1] : memref<2x128xf32, #tpu.memory_space<vmem>>, vector<2x128xf32>
    %c0_2 = arith.constant 0 : index
    %c0_3 = arith.constant 0 : index
    %4 = vector.load %arg7[%c0_2, %c0_3] : memref<2x128xf32, #tpu.memory_space<vmem>>, vector<2x128xf32>
    %c0_i32_4 = arith.constant 0 : i32
    %c0_5 = arith.constant 0 : index
    %c0_6 = arith.constant 0 : index
    %5 = vector.load %arg2[%c0_5, %c0_6] : memref<128x512xf32, #tpu.memory_space<vmem>>, vector<128x512xf32>
    %cst = arith.constant dense<0.000000e+00> : vector<2x512xf32>
    %6 = tpu.matmul %3, %5, %cst {dimension_numbers = #tpu.dot_dimension_numbers<[1], [0], [0], [1], [0, 0, 1, 1], [], []>} : vector<2x128xf32>, vector<128x512xf32>, vector<2x512xf32> -> vector<2x512xf32>
    %7 = arith.index_cast %c0_i32_4 : i32 to index
    %c0_7 = arith.constant 0 : index
    %c0_8 = arith.constant 0 : index
    %8 = vector.load %arg1[%7, %c0_7, %c0_8] : memref<8x2x512xf32, #tpu.memory_space<vmem>>, vector<1x2x512xf32>
    %9 = vector.shape_cast %8 : vector<1x2x512xf32> to vector<2x512xf32>
    %10 = arith.addf %6, %9 : vector<2x512xf32>
    %11 = vector.extract_strided_slice %10 {offsets = [0, 0], sizes = [2, 128], strides = [1, 1]} : vector<2x512xf32> to vector<2x128xf32>
    %12 = arith.negf %11 : vector<2x128xf32>
    %13 = math.exp %12 : vector<2x128xf32>
    %cst_9 = arith.constant 1.000000e+00 : f32
    %14 = vector.broadcast %cst_9 : f32 to vector<2x128xf32>
    %15 = arith.addf %14, %13 : vector<2x128xf32>
    %16 = arith.divf %14, %15 : vector<2x128xf32>
    %17 = vector.extract_strided_slice %10 {offsets = [0, 128], sizes = [2, 128], strides = [1, 1]} : vector<2x512xf32> to vector<2x128xf32>
    %18 = arith.negf %17 : vector<2x128xf32>
    %19 = math.exp %18 : vector<2x128xf32>
    %cst_10 = arith.constant 1.000000e+00 : f32
    %20 = vector.broadcast %cst_10 : f32 to vector<2x128xf32>
    %21 = arith.addf %20, %19 : vector<2x128xf32>
    %22 = arith.divf %20, %21 : vector<2x128xf32>
    %23 = vector.extract_strided_slice %10 {offsets = [0, 256], sizes = [2, 128], strides = [1, 1]} : vector<2x512xf32> to vector<2x128xf32>
    %24 = math.tanh %23 : vector<2x128xf32>
    %25 = vector.extract_strided_slice %10 {offsets = [0, 384], sizes = [2, 128], strides = [1, 1]} : vector<2x512xf32> to vector<2x128xf32>
    %26 = arith.negf %25 : vector<2x128xf32>
    %27 = math.exp %26 : vector<2x128xf32>
    %cst_11 = arith.constant 1.000000e+00 : f32
    %28 = vector.broadcast %cst_11 : f32 to vector<2x128xf32>
    %29 = arith.addf %28, %27 : vector<2x128xf32>
    %30 = arith.divf %28, %29 : vector<2x128xf32>
    %31 = arith.mulf %22, %4 : vector<2x128xf32>
    %32 = arith.mulf %16, %24 : vector<2x128xf32>
    %33 = arith.addf %31, %32 : vector<2x128xf32>
    %34 = math.tanh %33 : vector<2x128xf32>
    %35 = arith.mulf %30, %34 : vector<2x128xf32>
    %c1_i32 = arith.constant 1 : i32
    %c0_12 = arith.constant 0 : index
    %c0_13 = arith.constant 0 : index
    %36 = vector.load %arg2[%c0_12, %c0_13] : memref<128x512xf32, #tpu.memory_space<vmem>>, vector<128x512xf32>
    %cst_14 = arith.constant dense<0.000000e+00> : vector<2x512xf32>
    %37 = tpu.matmul %35, %36, %cst_14 {dimension_numbers = #tpu.dot_dimension_numbers<[1], [0], [0], [1], [0, 0, 1, 1], [], []>} : vector<2x128xf32>, vector<128x512xf32>, vector<2x512xf32> -> vector<2x512xf32>
    %38 = arith.index_cast %c1_i32 : i32 to index
    %c0_15 = arith.constant 0 : index
    %c0_16 = arith.constant 0 : index
    %39 = vector.load %arg1[%38, %c0_15, %c0_16] : memref<8x2x512xf32, #tpu.memory_space<vmem>>, vector<1x2x512xf32>
    %40 = vector.shape_cast %39 : vector<1x2x512xf32> to vector<2x512xf32>
    %41 = arith.addf %37, %40 : vector<2x512xf32>
    %42 = vector.extract_strided_slice %41 {offsets = [0, 0], sizes = [2, 128], strides = [1, 1]} : vector<2x512xf32> to vector<2x128xf32>
    %43 = arith.negf %42 : vector<2x128xf32>
    %44 = math.exp %43 : vector<2x128xf32>
    %cst_17 = arith.constant 1.000000e+00 : f32
    %45 = vector.broadcast %cst_17 : f32 to vector<2x128xf32>
    %46 = arith.addf %45, %44 : vector<2x128xf32>
    %47 = arith.divf %45, %46 : vector<2x128xf32>
    %48 = vector.extract_strided_slice %41 {offsets = [0, 128], sizes = [2, 128], strides = [1, 1]} : vector<2x512xf32> to vector<2x128xf32>
    %49 = arith.negf %48 : vector<2x128xf32>
    %50 = math.exp %49 : vector<2x128xf32>
    %cst_18 = arith.constant 1.000000e+00 : f32
    %51 = vector.broadcast %cst_18 : f32 to vector<2x128xf32>
    %52 = arith.addf %51, %50 : vector<2x128xf32>
    %53 = arith.divf %51, %52 : vector<2x128xf32>
    %54 = vector.extract_strided_slice %41 {offsets = [0, 256], sizes = [2, 128], strides = [1, 1]} : vector<2x512xf32> to vector<2x128xf32>
    %55 = math.tanh %54 : vector<2x128xf32>
    %56 = vector.extract_strided_slice %41 {offsets = [0, 384], sizes = [2, 128], strides = [1, 1]} : vector<2x512xf32> to vector<2x128xf32>
    %57 = arith.negf %56 : vector<2x128xf32>
    %58 = math.exp %57 : vector<2x128xf32>
    %cst_19 = arith.constant 1.000000e+00 : f32
    %59 = vector.broadcast %cst_19 : f32 to vector<2x128xf32>
    %60 = arith.addf %59, %58 : vector<2x128xf32>
    %61 = arith.divf %59, %60 : vector<2x128xf32>
    %62 = arith.mulf %53, %33 : vector<2x128xf32>
    %63 = arith.mulf %47, %55 : vector<2x128xf32>
    %64 = arith.addf %62, %63 : vector<2x128xf32>
    %65 = math.tanh %64 : vector<2x128xf32>
    %66 = arith.mulf %61, %65 : vector<2x128xf32>
    %c2_i32 = arith.constant 2 : i32
    %c0_20 = arith.constant 0 : index
    %c0_21 = arith.constant 0 : index
    %67 = vector.load %arg2[%c0_20, %c0_21] : memref<128x512xf32, #tpu.memory_space<vmem>>, vector<128x512xf32>
    %cst_22 = arith.constant dense<0.000000e+00> : vector<2x512xf32>
    %68 = tpu.matmul %66, %67, %cst_22 {dimension_numbers = #tpu.dot_dimension_numbers<[1], [0], [0], [1], [0, 0, 1, 1], [], []>} : vector<2x128xf32>, vector<128x512xf32>, vector<2x512xf32> -> vector<2x512xf32>
    %69 = arith.index_cast %c2_i32 : i32 to index
    %c0_23 = arith.constant 0 : index
    %c0_24 = arith.constant 0 : index
    %70 = vector.load %arg1[%69, %c0_23, %c0_24] : memref<8x2x512xf32, #tpu.memory_space<vmem>>, vector<1x2x512xf32>
    %71 = vector.shape_cast %70 : vector<1x2x512xf32> to vector<2x512xf32>
    %72 = arith.addf %68, %71 : vector<2x512xf32>
    %73 = vector.extract_strided_slice %72 {offsets = [0, 0], sizes = [2, 128], strides = [1, 1]} : vector<2x512xf32> to vector<2x128xf32>
    %74 = arith.negf %73 : vector<2x128xf32>
    %75 = math.exp %74 : vector<2x128xf32>
    %cst_25 = arith.constant 1.000000e+00 : f32
    %76 = vector.broadcast %cst_25 : f32 to vector<2x128xf32>
    %77 = arith.addf %76, %75 : vector<2x128xf32>
    %78 = arith.divf %76, %77 : vector<2x128xf32>
    %79 = vector.extract_strided_slice %72 {offsets = [0, 128], sizes = [2, 128], strides = [1, 1]} : vector<2x512xf32> to vector<2x128xf32>
    %80 = arith.negf %79 : vector<2x128xf32>
    %81 = math.exp %80 : vector<2x128xf32>
    %cst_26 = arith.constant 1.000000e+00 : f32
    %82 = vector.broadcast %cst_26 : f32 to vector<2x128xf32>
    %83 = arith.addf %82, %81 : vector<2x128xf32>
    %84 = arith.divf %82, %83 : vector<2x128xf32>
    %85 = vector.extract_strided_slice %72 {offsets = [0, 256], sizes = [2, 128], strides = [1, 1]} : vector<2x512xf32> to vector<2x128xf32>
    %86 = math.tanh %85 : vector<2x128xf32>
    %87 = vector.extract_strided_slice %72 {offsets = [0, 384], sizes = [2, 128], strides = [1, 1]} : vector<2x512xf32> to vector<2x128xf32>
    %88 = arith.negf %87 : vector<2x128xf32>
    %89 = math.exp %88 : vector<2x128xf32>
    %cst_27 = arith.constant 1.000000e+00 : f32
    %90 = vector.broadcast %cst_27 : f32 to vector<2x128xf32>
    %91 = arith.addf %90, %89 : vector<2x128xf32>
    %92 = arith.divf %90, %91 : vector<2x128xf32>
    %93 = arith.mulf %84, %64 : vector<2x128xf32>
    %94 = arith.mulf %78, %86 : vector<2x128xf32>
    %95 = arith.addf %93, %94 : vector<2x128xf32>
    %96 = math.tanh %95 : vector<2x128xf32>
    %97 = arith.mulf %92, %96 : vector<2x128xf32>
    %c3_i32 = arith.constant 3 : i32
    %c0_28 = arith.constant 0 : index
    %c0_29 = arith.constant 0 : index
    %98 = vector.load %arg2[%c0_28, %c0_29] : memref<128x512xf32, #tpu.memory_space<vmem>>, vector<128x512xf32>
    %cst_30 = arith.constant dense<0.000000e+00> : vector<2x512xf32>
    %99 = tpu.matmul %97, %98, %cst_30 {dimension_numbers = #tpu.dot_dimension_numbers<[1], [0], [0], [1], [0, 0, 1, 1], [], []>} : vector<2x128xf32>, vector<128x512xf32>, vector<2x512xf32> -> vector<2x512xf32>
    %100 = arith.index_cast %c3_i32 : i32 to index
    %c0_31 = arith.constant 0 : index
    %c0_32 = arith.constant 0 : index
    %101 = vector.load %arg1[%100, %c0_31, %c0_32] : memref<8x2x512xf32, #tpu.memory_space<vmem>>, vector<1x2x512xf32>
    %102 = vector.shape_cast %101 : vector<1x2x512xf32> to vector<2x512xf32>
    %103 = arith.addf %99, %102 : vector<2x512xf32>
    %104 = vector.extract_strided_slice %103 {offsets = [0, 0], sizes = [2, 128], strides = [1, 1]} : vector<2x512xf32> to vector<2x128xf32>
    %105 = arith.negf %104 : vector<2x128xf32>
    %106 = math.exp %105 : vector<2x128xf32>
    %cst_33 = arith.constant 1.000000e+00 : f32
    %107 = vector.broadcast %cst_33 : f32 to vector<2x128xf32>
    %108 = arith.addf %107, %106 : vector<2x128xf32>
    %109 = arith.divf %107, %108 : vector<2x128xf32>
    %110 = vector.extract_strided_slice %103 {offsets = [0, 128], sizes = [2, 128], strides = [1, 1]} : vector<2x512xf32> to vector<2x128xf32>
    %111 = arith.negf %110 : vector<2x128xf32>
    %112 = math.exp %111 : vector<2x128xf32>
    %cst_34 = arith.constant 1.000000e+00 : f32
    %113 = vector.broadcast %cst_34 : f32 to vector<2x128xf32>
    %114 = arith.addf %113, %112 : vector<2x128xf32>
    %115 = arith.divf %113, %114 : vector<2x128xf32>
    %116 = vector.extract_strided_slice %103 {offsets = [0, 256], sizes = [2, 128], strides = [1, 1]} : vector<2x512xf32> to vector<2x128xf32>
    %117 = math.tanh %116 : vector<2x128xf32>
    %118 = vector.extract_strided_slice %103 {offsets = [0, 384], sizes = [2, 128], strides = [1, 1]} : vector<2x512xf32> to vector<2x128xf32>
    %119 = arith.negf %118 : vector<2x128xf32>
    %120 = math.exp %119 : vector<2x128xf32>
    %cst_35 = arith.constant 1.000000e+00 : f32
    %121 = vector.broadcast %cst_35 : f32 to vector<2x128xf32>
    %122 = arith.addf %121, %120 : vector<2x128xf32>
    %123 = arith.divf %121, %122 : vector<2x128xf32>
    %124 = arith.mulf %115, %95 : vector<2x128xf32>
    %125 = arith.mulf %109, %117 : vector<2x128xf32>
    %126 = arith.addf %124, %125 : vector<2x128xf32>
    %127 = math.tanh %126 : vector<2x128xf32>
    %128 = arith.mulf %123, %127 : vector<2x128xf32>
    %c4_i32 = arith.constant 4 : i32
    %c0_36 = arith.constant 0 : index
    %c0_37 = arith.constant 0 : index
    %129 = vector.load %arg2[%c0_36, %c0_37] : memref<128x512xf32, #tpu.memory_space<vmem>>, vector<128x512xf32>
    %cst_38 = arith.constant dense<0.000000e+00> : vector<2x512xf32>
    %130 = tpu.matmul %128, %129, %cst_38 {dimension_numbers = #tpu.dot_dimension_numbers<[1], [0], [0], [1], [0, 0, 1, 1], [], []>} : vector<2x128xf32>, vector<128x512xf32>, vector<2x512xf32> -> vector<2x512xf32>
    %131 = arith.index_cast %c4_i32 : i32 to index
    %c0_39 = arith.constant 0 : index
    %c0_40 = arith.constant 0 : index
    %132 = vector.load %arg1[%131, %c0_39, %c0_40] : memref<8x2x512xf32, #tpu.memory_space<vmem>>, vector<1x2x512xf32>
    %133 = vector.shape_cast %132 : vector<1x2x512xf32> to vector<2x512xf32>
    %134 = arith.addf %130, %133 : vector<2x512xf32>
    %135 = vector.extract_strided_slice %134 {offsets = [0, 0], sizes = [2, 128], strides = [1, 1]} : vector<2x512xf32> to vector<2x128xf32>
    %136 = arith.negf %135 : vector<2x128xf32>
    %137 = math.exp %136 : vector<2x128xf32>
    %cst_41 = arith.constant 1.000000e+00 : f32
    %138 = vector.broadcast %cst_41 : f32 to vector<2x128xf32>
    %139 = arith.addf %138, %137 : vector<2x128xf32>
    %140 = arith.divf %138, %139 : vector<2x128xf32>
    %141 = vector.extract_strided_slice %134 {offsets = [0, 128], sizes = [2, 128], strides = [1, 1]} : vector<2x512xf32> to vector<2x128xf32>
    %142 = arith.negf %141 : vector<2x128xf32>
    %143 = math.exp %142 : vector<2x128xf32>
    %cst_42 = arith.constant 1.000000e+00 : f32
    %144 = vector.broadcast %cst_42 : f32 to vector<2x128xf32>
    %145 = arith.addf %144, %143 : vector<2x128xf32>
    %146 = arith.divf %144, %145 : vector<2x128xf32>
    %147 = vector.extract_strided_slice %134 {offsets = [0, 256], sizes = [2, 128], strides = [1, 1]} : vector<2x512xf32> to vector<2x128xf32>
    %148 = math.tanh %147 : vector<2x128xf32>
    %149 = vector.extract_strided_slice %134 {offsets = [0, 384], sizes = [2, 128], strides = [1, 1]} : vector<2x512xf32> to vector<2x128xf32>
    %150 = arith.negf %149 : vector<2x128xf32>
    %151 = math.exp %150 : vector<2x128xf32>
    %cst_43 = arith.constant 1.000000e+00 : f32
    %152 = vector.broadcast %cst_43 : f32 to vector<2x128xf32>
    %153 = arith.addf %152, %151 : vector<2x128xf32>
    %154 = arith.divf %152, %153 : vector<2x128xf32>
    %155 = arith.mulf %146, %126 : vector<2x128xf32>
    %156 = arith.mulf %140, %148 : vector<2x128xf32>
    %157 = arith.addf %155, %156 : vector<2x128xf32>
    %158 = math.tanh %157 : vector<2x128xf32>
    %159 = arith.mulf %154, %158 : vector<2x128xf32>
    %c5_i32 = arith.constant 5 : i32
    %c0_44 = arith.constant 0 : index
    %c0_45 = arith.constant 0 : index
    %160 = vector.load %arg2[%c0_44, %c0_45] : memref<128x512xf32, #tpu.memory_space<vmem>>, vector<128x512xf32>
    %cst_46 = arith.constant dense<0.000000e+00> : vector<2x512xf32>
    %161 = tpu.matmul %159, %160, %cst_46 {dimension_numbers = #tpu.dot_dimension_numbers<[1], [0], [0], [1], [0, 0, 1, 1], [], []>} : vector<2x128xf32>, vector<128x512xf32>, vector<2x512xf32> -> vector<2x512xf32>
    %162 = arith.index_cast %c5_i32 : i32 to index
    %c0_47 = arith.constant 0 : index
    %c0_48 = arith.constant 0 : index
    %163 = vector.load %arg1[%162, %c0_47, %c0_48] : memref<8x2x512xf32, #tpu.memory_space<vmem>>, vector<1x2x512xf32>
    %164 = vector.shape_cast %163 : vector<1x2x512xf32> to vector<2x512xf32>
    %165 = arith.addf %161, %164 : vector<2x512xf32>
    %166 = vector.extract_strided_slice %165 {offsets = [0, 0], sizes = [2, 128], strides = [1, 1]} : vector<2x512xf32> to vector<2x128xf32>
    %167 = arith.negf %166 : vector<2x128xf32>
    %168 = math.exp %167 : vector<2x128xf32>
    %cst_49 = arith.constant 1.000000e+00 : f32
    %169 = vector.broadcast %cst_49 : f32 to vector<2x128xf32>
    %170 = arith.addf %169, %168 : vector<2x128xf32>
    %171 = arith.divf %169, %170 : vector<2x128xf32>
    %172 = vector.extract_strided_slice %165 {offsets = [0, 128], sizes = [2, 128], strides = [1, 1]} : vector<2x512xf32> to vector<2x128xf32>
    %173 = arith.negf %172 : vector<2x128xf32>
    %174 = math.exp %173 : vector<2x128xf32>
    %cst_50 = arith.constant 1.000000e+00 : f32
    %175 = vector.broadcast %cst_50 : f32 to vector<2x128xf32>
    %176 = arith.addf %175, %174 : vector<2x128xf32>
    %177 = arith.divf %175, %176 : vector<2x128xf32>
    %178 = vector.extract_strided_slice %165 {offsets = [0, 256], sizes = [2, 128], strides = [1, 1]} : vector<2x512xf32> to vector<2x128xf32>
    %179 = math.tanh %178 : vector<2x128xf32>
    %180 = vector.extract_strided_slice %165 {offsets = [0, 384], sizes = [2, 128], strides = [1, 1]} : vector<2x512xf32> to vector<2x128xf32>
    %181 = arith.negf %180 : vector<2x128xf32>
    %182 = math.exp %181 : vector<2x128xf32>
    %cst_51 = arith.constant 1.000000e+00 : f32
    %183 = vector.broadcast %cst_51 : f32 to vector<2x128xf32>
    %184 = arith.addf %183, %182 : vector<2x128xf32>
    %185 = arith.divf %183, %184 : vector<2x128xf32>
    %186 = arith.mulf %177, %157 : vector<2x128xf32>
    %187 = arith.mulf %171, %179 : vector<2x128xf32>
    %188 = arith.addf %186, %187 : vector<2x128xf32>
    %189 = math.tanh %188 : vector<2x128xf32>
    %190 = arith.mulf %185, %189 : vector<2x128xf32>
    %c6_i32 = arith.constant 6 : i32
    %c0_52 = arith.constant 0 : index
    %c0_53 = arith.constant 0 : index
    %191 = vector.load %arg2[%c0_52, %c0_53] : memref<128x512xf32, #tpu.memory_space<vmem>>, vector<128x512xf32>
    %cst_54 = arith.constant dense<0.000000e+00> : vector<2x512xf32>
    %192 = tpu.matmul %190, %191, %cst_54 {dimension_numbers = #tpu.dot_dimension_numbers<[1], [0], [0], [1], [0, 0, 1, 1], [], []>} : vector<2x128xf32>, vector<128x512xf32>, vector<2x512xf32> -> vector<2x512xf32>
    %193 = arith.index_cast %c6_i32 : i32 to index
    %c0_55 = arith.constant 0 : index
    %c0_56 = arith.constant 0 : index
    %194 = vector.load %arg1[%193, %c0_55, %c0_56] : memref<8x2x512xf32, #tpu.memory_space<vmem>>, vector<1x2x512xf32>
    %195 = vector.shape_cast %194 : vector<1x2x512xf32> to vector<2x512xf32>
    %196 = arith.addf %192, %195 : vector<2x512xf32>
    %197 = vector.extract_strided_slice %196 {offsets = [0, 0], sizes = [2, 128], strides = [1, 1]} : vector<2x512xf32> to vector<2x128xf32>
    %198 = arith.negf %197 : vector<2x128xf32>
    %199 = math.exp %198 : vector<2x128xf32>
    %cst_57 = arith.constant 1.000000e+00 : f32
    %200 = vector.broadcast %cst_57 : f32 to vector<2x128xf32>
    %201 = arith.addf %200, %199 : vector<2x128xf32>
    %202 = arith.divf %200, %201 : vector<2x128xf32>
    %203 = vector.extract_strided_slice %196 {offsets = [0, 128], sizes = [2, 128], strides = [1, 1]} : vector<2x512xf32> to vector<2x128xf32>
    %204 = arith.negf %203 : vector<2x128xf32>
    %205 = math.exp %204 : vector<2x128xf32>
    %cst_58 = arith.constant 1.000000e+00 : f32
    %206 = vector.broadcast %cst_58 : f32 to vector<2x128xf32>
    %207 = arith.addf %206, %205 : vector<2x128xf32>
    %208 = arith.divf %206, %207 : vector<2x128xf32>
    %209 = vector.extract_strided_slice %196 {offsets = [0, 256], sizes = [2, 128], strides = [1, 1]} : vector<2x512xf32> to vector<2x128xf32>
    %210 = math.tanh %209 : vector<2x128xf32>
    %211 = vector.extract_strided_slice %196 {offsets = [0, 384], sizes = [2, 128], strides = [1, 1]} : vector<2x512xf32> to vector<2x128xf32>
    %212 = arith.negf %211 : vector<2x128xf32>
    %213 = math.exp %212 : vector<2x128xf32>
    %cst_59 = arith.constant 1.000000e+00 : f32
    %214 = vector.broadcast %cst_59 : f32 to vector<2x128xf32>
    %215 = arith.addf %214, %213 : vector<2x128xf32>
    %216 = arith.divf %214, %215 : vector<2x128xf32>
    %217 = arith.mulf %208, %188 : vector<2x128xf32>
    %218 = arith.mulf %202, %210 : vector<2x128xf32>
    %219 = arith.addf %217, %218 : vector<2x128xf32>
    %220 = math.tanh %219 : vector<2x128xf32>
    %221 = arith.mulf %216, %220 : vector<2x128xf32>
    %c7_i32 = arith.constant 7 : i32
    %c0_60 = arith.constant 0 : index
    %c0_61 = arith.constant 0 : index
    %222 = vector.load %arg2[%c0_60, %c0_61] : memref<128x512xf32, #tpu.memory_space<vmem>>, vector<128x512xf32>
    %cst_62 = arith.constant dense<0.000000e+00> : vector<2x512xf32>
    %223 = tpu.matmul %221, %222, %cst_62 {dimension_numbers = #tpu.dot_dimension_numbers<[1], [0], [0], [1], [0, 0, 1, 1], [], []>} : vector<2x128xf32>, vector<128x512xf32>, vector<2x512xf32> -> vector<2x512xf32>
    %224 = arith.index_cast %c7_i32 : i32 to index
    %c0_63 = arith.constant 0 : index
    %c0_64 = arith.constant 0 : index
    %225 = vector.load %arg1[%224, %c0_63, %c0_64] : memref<8x2x512xf32, #tpu.memory_space<vmem>>, vector<1x2x512xf32>
    %226 = vector.shape_cast %225 : vector<1x2x512xf32> to vector<2x512xf32>
    %227 = arith.addf %223, %226 : vector<2x512xf32>
    %228 = vector.extract_strided_slice %227 {offsets = [0, 0], sizes = [2, 128], strides = [1, 1]} : vector<2x512xf32> to vector<2x128xf32>
    %229 = arith.negf %228 : vector<2x128xf32>
    %230 = math.exp %229 : vector<2x128xf32>
    %cst_65 = arith.constant 1.000000e+00 : f32
    %231 = vector.broadcast %cst_65 : f32 to vector<2x128xf32>
    %232 = arith.addf %231, %230 : vector<2x128xf32>
    %233 = arith.divf %231, %232 : vector<2x128xf32>
    %234 = vector.extract_strided_slice %227 {offsets = [0, 128], sizes = [2, 128], strides = [1, 1]} : vector<2x512xf32> to vector<2x128xf32>
    %235 = arith.negf %234 : vector<2x128xf32>
    %236 = math.exp %235 : vector<2x128xf32>
    %cst_66 = arith.constant 1.000000e+00 : f32
    %237 = vector.broadcast %cst_66 : f32 to vector<2x128xf32>
    %238 = arith.addf %237, %236 : vector<2x128xf32>
    %239 = arith.divf %237, %238 : vector<2x128xf32>
    %240 = vector.extract_strided_slice %227 {offsets = [0, 256], sizes = [2, 128], strides = [1, 1]} : vector<2x512xf32> to vector<2x128xf32>
    %241 = math.tanh %240 : vector<2x128xf32>
    %242 = vector.extract_strided_slice %227 {offsets = [0, 384], sizes = [2, 128], strides = [1, 1]} : vector<2x512xf32> to vector<2x128xf32>
    %243 = arith.negf %242 : vector<2x128xf32>
    %244 = math.exp %243 : vector<2x128xf32>
    %cst_67 = arith.constant 1.000000e+00 : f32
    %245 = vector.broadcast %cst_67 : f32 to vector<2x128xf32>
    %246 = arith.addf %245, %244 : vector<2x128xf32>
    %247 = arith.divf %245, %246 : vector<2x128xf32>
    %248 = arith.mulf %239, %219 : vector<2x128xf32>
    %249 = arith.mulf %233, %241 : vector<2x128xf32>
    %250 = arith.addf %248, %249 : vector<2x128xf32>
    %251 = math.tanh %250 : vector<2x128xf32>
    %252 = arith.mulf %247, %251 : vector<2x128xf32>
    %c8_i32 = arith.constant 8 : i32
    %c0_68 = arith.constant 0 : index
    %c0_69 = arith.constant 0 : index
    %253 = vector.load %arg6[%c0_68, %c0_69] : memref<2x128xf32, #tpu.memory_space<vmem>>, vector<2x128xf32>
    tpu.vector_store %arg6[%c0_68, %c0_69], %252 {strides = array<i32>} : memref<2x128xf32, #tpu.memory_space<vmem>>, vector<2x128xf32>,
    %c0_70 = arith.constant 0 : index
    %c0_71 = arith.constant 0 : index
    %254 = vector.load %arg7[%c0_70, %c0_71] : memref<2x128xf32, #tpu.memory_space<vmem>>, vector<2x128xf32>
    tpu.vector_store %arg7[%c0_70, %c0_71], %250 {strides = array<i32>} : memref<2x128xf32, #tpu.memory_space<vmem>>, vector<2x128xf32>,
    %c0_i32_72 = arith.constant 0 : i32
    %255 = arith.cmpi eq, %arg0, %c0_i32_72 : i32
    %256 = arith.extui %255 : i1 to i32
    %c0_i32_73 = arith.constant 0 : i32
    %257 = arith.cmpi ne, %256, %c0_i32_73 : i32
    scf.if %257 {
      %c0_74 = arith.constant 0 : index
      %c0_75 = arith.constant 0 : index
      %258 = vector.load %arg3[%c0_74, %c0_75] : memref<1x128xf32, #tpu.memory_space<vmem>>, vector<1x128xf32>
      %259 = vector.broadcast %258 : vector<1x128xf32> to vector<2x128xf32>
      %260 = arith.mulf %252, %259 : vector<2x128xf32>
      %cst_76 = arith.constant dense<0.000000e+00> : vector<2xf32>
      %261 = vector.multi_reduction <add>, %260, %cst_76 [1] : vector<2x128xf32> to vector<2xf32>
      %262 = vector.shape_cast %261 : vector<2xf32> to vector<2x1xf32>
      %c0_77 = arith.constant 0 : index
      %c0_78 = arith.constant 0 : index
      %263 = memref.load %arg4[%c0_77, %c0_78] : memref<1x1xf32, #tpu.memory_space<smem>>
      %264 = vector.broadcast %263 : f32 to vector<2x1xf32>
      %265 = arith.addf %262, %264 : vector<2x1xf32>
      %c0_79 = arith.constant 0 : index
      %c0_80 = arith.constant 0 : index
      %266 = vector.load %arg5[%c0_79, %c0_80] : memref<2x1xf32, #tpu.memory_space<vmem>>, vector<2x1xf32>
      tpu.vector_store %arg5[%c0_79, %c0_80], %265 {strides = array<i32>} : memref<2x1xf32, #tpu.memory_space<vmem>>, vector<2x1xf32>,
    } else {
    }
    return
  }
  func.func @transform_0(%arg0: i32) -> (i32, i32, i32) {
    %c0_i32 = arith.constant 0 : i32
    %c0_i32_0 = arith.constant 0 : i32
    %c0_i32_1 = arith.constant 0 : i32
    return %arg0, %c0_i32, %c0_i32_0 : i32, i32, i32
  }
  func.func @transform_1(%arg0: i32) -> (i32, i32) {
    %c0_i32 = arith.constant 0 : i32
    %c0_i32_0 = arith.constant 0 : i32
    %c0_i32_1 = arith.constant 0 : i32
    return %c0_i32, %c0_i32_0 : i32, i32
  }
  func.func @transform_2(%arg0: i32) -> (i32, i32) {
    %c0_i32 = arith.constant 0 : i32
    %c0_i32_0 = arith.constant 0 : i32
    %c0_i32_1 = arith.constant 0 : i32
    return %c0_i32, %c0_i32_0 : i32, i32
  }
  func.func @transform_3(%arg0: i32) -> (i32, i32) {
    %c0_i32 = arith.constant 0 : i32
    %c0_i32_0 = arith.constant 0 : i32
    %c0_i32_1 = arith.constant 0 : i32
    return %c0_i32, %c0_i32_0 : i32, i32
  }
  func.func @transform_4(%arg0: i32) -> (i32, i32) {
    %c0_i32 = arith.constant 0 : i32
    %c0_i32_0 = arith.constant 0 : i32
    %c0_i32_1 = arith.constant 0 : i32
    return %c0_i32, %c0_i32_0 : i32, i32
  }
}

</mosaic_0001>

<llo_original>
// kernel: tpu_custom_call.1
$region0: #{tpu_custom_call.1}
  #allocation0 [shape = 'u32[]', space=smem, size = 0x4, offset = 0x4, fixed_abs, tag = 'smem constant byte address 0x4 - core index']
  #allocation1 [shape = 'u32[144,128]{1,0:T(1,128)}', space=vmem, size = 0x12000, scoped, tag = 'internal scratch']
  #allocation2 [shape = 'f32[2,128]{1,0:T(2,128)}', space=vmem, size = 0x400, scoped, tag = 'scratch operand']
  #allocation3 [shape = 'f32[2,128]{1,0:T(2,128)}', space=vmem, size = 0x400, scoped, tag = 'scratch operand']
  #allocation4 [shape = 'f32[1,1]{1,0:T(1,128)S(6)}', space=smem, size = 0x200, scoped, tag = 'scoped memory for tpu_custom_call.1']
  %s0 = inlined_call_operand.hbm [shape: f32[8,2,512], index: 0, kind: input, shape index: {}]
  %s1 = inlined_call_operand.hbm [shape: f32[128,512], index: 1, kind: input, shape index: {}]
  %s2 = inlined_call_operand.vmem [shape: f32[1,128], index: 2, kind: input, shape index: {}]
  %s3 = inlined_call_operand.<no memory space> [shape: f32[1,1], index: 3, kind: input, shape index: {}]
  %s4 = inlined_call_operand.vmem [shape: f32[2,1], index: 4, kind: output, shape index: {}]
  %s5 = sld [smem:[#allocation0]]
  $region42: #{tpu_custom_call.1} parent=0
    _
  %s7 = ssub.s32 1, %s5
  %s8 = scalar_select 0, %s7, %s5
  %9 = sst [smem:[#allocation4]] %s3
  $region1: #{tpu_custom_call.1} parent=0
    #allocation5 [shape = 'u8[32768]{0}', space=vmem, size = 0x8000, scoped, tag = 'input window, operand 0, single buffered']
    #allocation6 [shape = 's32[1]{0}', space=sflag, size = 0x4, scoped, tag = 'scoped memory for tpu_custom_call.1']
    #allocation7 [shape = 'u8[262144]{0}', space=vmem, size = 0x40000, scoped, tag = 'input window, operand 1, single buffered']
    #allocation8 [shape = 's32[1]{0}', space=sflag, size = 0x4, scoped, tag = 'scoped memory for tpu_custom_call.1']
    %10 = vsyncpa [#allocation6], 0
    %11 = vsyncpa [#allocation8], 0
    // Predicated region
    $region2: #{tpu_custom_call.1} parent=1 // pred_check
      _
    $region3: #{tpu_custom_call.1} parent=1 // pred_check_branch
      %13 = sbr.rel (0) target = $region5
    $region4: #{tpu_custom_call.1} parent=1 // pred_region
      %s15 = ssub.s32 1024, 1024
      %16 = vsyncadd [#allocation6], %s15
      %s17 = sshll.u32 [#allocation5], 4
      %s18 = int_to_ptr.vmem [resolvable:$true] %s17
      %23 = dma.hbm_to_vmem [thread:$0]  %s0, 1024, %s18, [#allocation6], 128, 128, 8
    $region5: #{tpu_custom_call.1} parent=1 // pred_fallthru
      _
    // Predicated region
    $region6: #{tpu_custom_call.1} parent=1 // pred_check
      _
    $region7: #{tpu_custom_call.1} parent=1 // pred_check_branch
      %25 = sbr.rel (0) target = $region9
    $region8: #{tpu_custom_call.1} parent=1 // pred_region
      %s27 = ssub.s32 8192, 8192
      %28 = vsyncadd [#allocation8], %s27
      %s29 = sshll.u32 [#allocation7], 4
      %s30 = int_to_ptr.vmem [resolvable:$true] %s29
      %35 = dma.hbm_to_vmem [thread:$0]  %s1, 8192, %s30, [#allocation8], 512, 512, 32
    $region9: #{tpu_custom_call.1} parent=1 // pred_fallthru
      _
    // Predicated region
    $region10: #{tpu_custom_call.1} parent=1 // pred_check
      _
    $region11: #{tpu_custom_call.1} parent=1 // pred_check_branch
      %37 = sbr.rel (0) target = $region13
    $region12: #{tpu_custom_call.1} parent=1 // pred_region
      _
    $region13: #{tpu_custom_call.1} parent=1 // pred_fallthru
      _
    // Predicated region
    $region14: #{tpu_custom_call.1} parent=1 // pred_check
      _
    $region15: #{tpu_custom_call.1} parent=1 // pred_check_branch
      %39 = sbr.rel (0) target = $region17
    $region16: #{tpu_custom_call.1} parent=1 // pred_region
      _
    $region17: #{tpu_custom_call.1} parent=1 // pred_fallthru
      _
    // Predicated region
    $region18: #{tpu_custom_call.1} parent=1 // pred_check
      _
    $region19: #{tpu_custom_call.1} parent=1 // pred_check_branch
      %41 = sbr.rel (0) target = $region21
    $region20: #{tpu_custom_call.1} parent=1 // pred_region
      %42 = dma.done [#allocation6], 1024
    $region21: #{tpu_custom_call.1} parent=1 // pred_fallthru
      _
    // Predicated region
    $region22: #{tpu_custom_call.1} parent=1 // pred_check
      _
    $region23: #{tpu_custom_call.1} parent=1 // pred_check_branch
      %44 = sbr.rel (0) target = $region25
    $region24: #{tpu_custom_call.1} parent=1 // pred_region
      %45 = dma.done [#allocation8], 8192
    $region25: #{tpu_custom_call.1} parent=1 // pred_fallthru
      _
    %p46 = scmp.eq.s32.totalorder 0, 0
    // Predicated region
    $region26: #{tpu_custom_call.1} parent=1 // pred_check
      %p47 = pneg %p46
    $region27: #{tpu_custom_call.1} parent=1 // pred_check_branch
      %49 = sbr.rel (%p47) target = $region29
    $region28: #{tpu_custom_call.1} parent=1 // pred_region
      %50 = vst [vmem:[#allocation2] sm:$0x3] 0.0
      %51 = vst [vmem:[#allocation3] sm:$0x3] 0.0
    $region29: #{tpu_custom_call.1} parent=1 // pred_fallthru
      _
    %v52 = vld [vmem:[#allocation2] sm:$0x3]
    %v53 = vld [vmem:[#allocation3] sm:$0x3]
    %v54 = vld [vmem:[#allocation7] sm:$0xff]
    %v55 = vld [vmem:[#allocation7 + $0x8] sm:$0xff]
    %v56 = vld [vmem:[#allocation7 + $0x10] sm:$0xff]
    %v57 = vld [vmem:[#allocation7 + $0x18] sm:$0xff]
    %v58 = vld [vmem:[#allocation7 + $0x20] sm:$0xff]
    %v59 = vld [vmem:[#allocation7 + $0x28] sm:$0xff]
    %v60 = vld [vmem:[#allocation7 + $0x30] sm:$0xff]
    %v61 = vld [vmem:[#allocation7 + $0x38] sm:$0xff]
    %v62 = vld [vmem:[#allocation7 + $0x40] sm:$0xff]
    %v63 = vld [vmem:[#allocation7 + $0x48] sm:$0xff]
    %v64 = vld [vmem:[#allocation7 + $0x50] sm:$0xff]
    %v65 = vld [vmem:[#allocation7 + $0x58] sm:$0xff]
    %v66 = vld [vmem:[#allocation7 + $0x60] sm:$0xff]
    %v67 = vld [vmem:[#allocation7 + $0x68] sm:$0xff]
    %v68 = vld [vmem:[#allocation7 + $0x70] sm:$0xff]
    %v69 = vld [vmem:[#allocation7 + $0x78] sm:$0xff]
    %v70 = vld [vmem:[#allocation7 + $0x80] sm:$0xff]
    %v71 = vld [vmem:[#allocation7 + $0x88] sm:$0xff]
    %v72 = vld [vmem:[#allocation7 + $0x90] sm:$0xff]
    %v73 = vld [vmem:[#allocation7 + $0x98] sm:$0xff]
    %v74 = vld [vmem:[#allocation7 + $0xa0] sm:$0xff]
    %v75 = vld [vmem:[#allocation7 + $0xa8] sm:$0xff]
    %v76 = vld [vmem:[#allocation7 + $0xb0] sm:$0xff]
    %v77 = vld [vmem:[#allocation7 + $0xb8] sm:$0xff]
    %v78 = vld [vmem:[#allocation7 + $0xc0] sm:$0xff]
    %v79 = vld [vmem:[#allocation7 + $0xc8] sm:$0xff]
    %v80 = vld [vmem:[#allocation7 + $0xd0] sm:$0xff]
    %v81 = vld [vmem:[#allocation7 + $0xd8] sm:$0xff]
    %v82 = vld [vmem:[#allocation7 + $0xe0] sm:$0xff]
    %v83 = vld [vmem:[#allocation7 + $0xe8] sm:$0xff]
    %v84 = vld [vmem:[#allocation7 + $0xf0] sm:$0xff]
    %v85 = vld [vmem:[#allocation7 + $0xf8] sm:$0xff]
    %v86 = vld [vmem:[#allocation7 + $0x100] sm:$0xff]
    %v87 = vld [vmem:[#allocation7 + $0x108] sm:$0xff]
    %v88 = vld [vmem:[#allocation7 + $0x110] sm:$0xff]
    %v89 = vld [vmem:[#allocation7 + $0x118] sm:$0xff]
    %v90 = vld [vmem:[#allocation7 + $0x120] sm:$0xff]
    %v91 = vld [vmem:[#allocation7 + $0x128] sm:$0xff]
    %v92 = vld [vmem:[#allocation7 + $0x130] sm:$0xff]
    %v93 = vld [vmem:[#allocation7 + $0x138] sm:$0xff]
    %v94 = vld [vmem:[#allocation7 + $0x140] sm:$0xff]
    %v95 = vld [vmem:[#allocation7 + $0x148] sm:$0xff]
    %v96 = vld [vmem:[#allocation7 + $0x150] sm:$0xff]
    %v97 = vld [vmem:[#allocation7 + $0x158] sm:$0xff]
    %v98 = vld [vmem:[#allocation7 + $0x160] sm:$0xff]
    %v99 = vld [vmem:[#allocation7 + $0x168] sm:$0xff]
    %v100 = vld [vmem:[#allocation7 + $0x170] sm:$0xff]
    %v101 = vld [vmem:[#allocation7 + $0x178] sm:$0xff]
    %v102 = vld [vmem:[#allocation7 + $0x180] sm:$0xff]
    %v103 = vld [vmem:[#allocation7 + $0x188] sm:$0xff]
    %v104 = vld [vmem:[#allocation7 + $0x190] sm:$0xff]
    %v105 = vld [vmem:[#allocation7 + $0x198] sm:$0xff]
    %v106 = vld [vmem:[#allocation7 + $0x1a0] sm:$0xff]
    %v107 = vld [vmem:[#allocation7 + $0x1a8] sm:$0xff]
    %v108 = vld [vmem:[#allocation7 + $0x1b0] sm:$0xff]
    %v109 = vld [vmem:[#allocation7 + $0x1b8] sm:$0xff]
    %v110 = vld [vmem:[#allocation7 + $0x1c0] sm:$0xff]
    %v111 = vld [vmem:[#allocation7 + $0x1c8] sm:$0xff]
    %v112 = vld [vmem:[#allocation7 + $0x1d0] sm:$0xff]
    %v113 = vld [vmem:[#allocation7 + $0x1d8] sm:$0xff]
    %v114 = vld [vmem:[#allocation7 + $0x1e0] sm:$0xff]
    %v115 = vld [vmem:[#allocation7 + $0x1e8] sm:$0xff]
    %v116 = vld [vmem:[#allocation7 + $0x1f0] sm:$0xff]
    %v117 = vld [vmem:[#allocation7 + $0x1f8] sm:$0xff]
    %v118 = vld [vmem:[#allocation5] sm:$0xff]
    %v120 = vcombine.high %v118, %v118
    %v122 = vunpack.c.l.s4 1983009808
    %v123 = vunpack.c.0.s8 %v122
    %v124 = vlaneseq
    %v125 = vshrl.u32 %v124, 7
    %v126 = vsub.s32 %v123, %v125
    %v127 = vrot.slane %v118, %v126
    %v129 = vunpack.c.l.s4 1983009808
    %v130 = vunpack.c.0.s8 %v129
    %v131 = vlaneseq
    %v132 = vshrl.u32 %v131, 7
    %v133 = vsub.s32 %v130, %v132
    %v134 = vrot.slane %v120, %v133
    %v135 = vcombine.high %v127, %v127
    %v136 = vcombine.high %v134, %v134
    %141 = vmatprep.subr.mxu0 %v55
    %142 = vmatpush1.msra.mxu0 %v54
    %143 = vmatprep.subr.mxu0 %v59
    %144 = vmatpush1.msra.mxu0 %v58
    %145 = vmatprep.subr.mxu0 %v63
    %146 = vmatpush1.msra.mxu0 %v62
    %147 = vmatprep.subr.mxu0 %v67
    %148 = vmatpush1.msra.mxu0 %v66
    %149 = vmatprep.subr.mxu0 %v71
    %150 = vmatpush1.msra.mxu0 %v70
    %151 = vmatprep.subr.mxu0 %v75
    %152 = vmatpush1.msra.mxu0 %v74
    %153 = vmatprep.subr.mxu0 %v79
    %154 = vmatpush1.msra.mxu0 %v78
    %155 = vmatprep.subr.mxu0 %v83
    %156 = vmatpush1.msra.mxu0 %v82
    %157 = vmatprep.subr.mxu0 %v87
    %158 = vmatpush1.msra.mxu0 %v86
    %159 = vmatprep.subr.mxu0 %v91
    %160 = vmatpush1.msra.mxu0 %v90
    %161 = vmatprep.subr.mxu0 %v95
    %162 = vmatpush1.msra.mxu0 %v94
    %163 = vmatprep.subr.mxu0 %v99
    %164 = vmatpush1.msra.mxu0 %v98
    %165 = vmatprep.subr.mxu0 %v103
    %166 = vmatpush1.msra.mxu0 %v102
    %167 = vmatprep.subr.mxu0 %v107
    %168 = vmatpush1.msra.mxu0 %v106
    %169 = vmatprep.subr.mxu0 %v111
    %170 = vmatpush1.msra.mxu0 %v110
    %171 = vmatprep.subr.mxu0 %v115
    %172 = vmatpush1.msra.mxu0 %v114
    %173 = vmatprep.subr.mxu0 0.0
    %174 = vmatpush1.msra.mxu0 0.0
    %175 = vmatprep.subr.mxu0 0.0
    %176 = vmatpush1.msra.mxu0 0.0
    %177 = vmatprep.subr.mxu0 0.0
    %178 = vmatpush1.msra.mxu0 0.0
    %179 = vmatprep.subr.mxu0 0.0
    %180 = vmatpush1.msra.mxu0 0.0
    %181 = vmatprep.subr.mxu0 0.0
    %182 = vmatpush1.msra.mxu0 0.0
    %183 = vmatprep.subr.mxu0 0.0
    %184 = vmatpush1.msra.mxu0 0.0
    %185 = vmatprep.subr.mxu0 0.0
    %186 = vmatpush1.msra.mxu0 0.0
    %187 = vmatprep.subr.mxu0 0.0
    %188 = vmatpush1.msra.mxu0 0.0
    %189 = vmatprep.subr.mxu0 0.0
    %190 = vmatpush1.msra.mxu0 0.0
    %191 = vmatprep.subr.mxu0 0.0
    %192 = vmatpush1.msra.mxu0 0.0
    %193 = vmatprep.subr.mxu0 0.0
    %194 = vmatpush1.msra.mxu0 0.0
    %195 = vmatprep.subr.mxu0 0.0
    %196 = vmatpush1.msra.mxu0 0.0
    %197 = vmatprep.subr.mxu0 0.0
    %198 = vmatpush1.msra.mxu0 0.0
    %199 = vmatprep.subr.mxu0 0.0
    %200 = vmatpush1.msra.mxu0 0.0
    %201 = vmatprep.subr.mxu0 0.0
    %202 = vmatpush1.msra.mxu0 0.0
    %203 = vmatprep.subr.mxu0 0.0
    %204 = vmatpush1.msra.mxu0 0.0
    %205 = vmatprep.mubr.f32.mxu0 0.0
    %206 = vmatmul.mubr.f32.gmra.mrb[0].mxu0 %v52
    %v207 = vpop.f32.mrb[0].mxu0
    %v208 = vadd.f32 %v127, %v207
    %v209 = vpop.f32.mrb[0].mxu0
    %v210 = vadd.f32 %v135, %v209
    %211 = vdwg.mxu0
    %212 = vmatprep.subr.mxu0 %v57
    %213 = vmatpush1.msra.mxu0 %v56
    %214 = vmatprep.subr.mxu0 %v61
    %215 = vmatpush1.msra.mxu0 %v60
    %216 = vmatprep.subr.mxu0 %v65
    %217 = vmatpush1.msra.mxu0 %v64
    %218 = vmatprep.subr.mxu0 %v69
    %219 = vmatpush1.msra.mxu0 %v68
    %220 = vmatprep.subr.mxu0 %v73
    %221 = vmatpush1.msra.mxu0 %v72
    %222 = vmatprep.subr.mxu0 %v77
    %223 = vmatpush1.msra.mxu0 %v76
    %224 = vmatprep.subr.mxu0 %v81
    %225 = vmatpush1.msra.mxu0 %v80
    %226 = vmatprep.subr.mxu0 %v85
    %227 = vmatpush1.msra.mxu0 %v84
    %228 = vmatprep.subr.mxu0 %v89
    %229 = vmatpush1.msra.mxu0 %v88
    %230 = vmatprep.subr.mxu0 %v93
    %231 = vmatpush1.msra.mxu0 %v92
    %232 = vmatprep.subr.mxu0 %v97
    %233 = vmatpush1.msra.mxu0 %v96
    %234 = vmatprep.subr.mxu0 %v101
    %235 = vmatpush1.msra.mxu0 %v100
    %236 = vmatprep.subr.mxu0 %v105
    %237 = vmatpush1.msra.mxu0 %v104
    %238 = vmatprep.subr.mxu0 %v109
    %239 = vmatpush1.msra.mxu0 %v108
    %240 = vmatprep.subr.mxu0 %v113
    %241 = vmatpush1.msra.mxu0 %v112
    %242 = vmatprep.subr.mxu0 %v117
    %243 = vmatpush1.msra.mxu0 %v116
    %244 = vmatprep.subr.mxu0 0.0
    %245 = vmatpush1.msra.mxu0 0.0
    %246 = vmatprep.subr.mxu0 0.0
    %247 = vmatpush1.msra.mxu0 0.0
    %248 = vmatprep.subr.mxu0 0.0
    %249 = vmatpush1.msra.mxu0 0.0
    %250 = vmatprep.subr.mxu0 0.0
    %251 = vmatpush1.msra.mxu0 0.0
    %252 = vmatprep.subr.mxu0 0.0
    %253 = vmatpush1.msra.mxu0 0.0
    %254 = vmatprep.subr.mxu0 0.0
    %255 = vmatpush1.msra.mxu0 0.0
    %256 = vmatprep.subr.mxu0 0.0
    %257 = vmatpush1.msra.mxu0 0.0
    %258 = vmatprep.subr.mxu0 0.0
    %259 = vmatpush1.msra.mxu0 0.0
    %260 = vmatprep.subr.mxu0 0.0
    %261 = vmatpush1.msra.mxu0 0.0
    %262 = vmatprep.subr.mxu0 0.0
    %263 = vmatpush1.msra.mxu0 0.0
    %264 = vmatprep.subr.mxu0 0.0
    %265 = vmatpush1.msra.mxu0 0.0
    %266 = vmatprep.subr.mxu0 0.0
    %267 = vmatpush1.msra.mxu0 0.0
    %268 = vmatprep.subr.mxu0 0.0
    %269 = vmatpush1.msra.mxu0 0.0
    %270 = vmatprep.subr.mxu0 0.0
    %271 = vmatpush1.msra.mxu0 0.0
    %272 = vmatprep.subr.mxu0 0.0
    %273 = vmatpush1.msra.mxu0 0.0
    %274 = vmatprep.subr.mxu0 0.0
    %275 = vmatpush1.msra.mxu0 0.0
    %276 = vmatprep.mubr.f32.mxu0 0.0
    %277 = vmatmul.mubr.f32.gmra.mrb[0].mxu0 %v52
    %v278 = vpop.f32.mrb[0].mxu0
    %v279 = vadd.f32 %v134, %v278
    %v280 = vpop.f32.mrb[0].mxu0
    %v281 = vadd.f32 %v136, %v280
    %282 = vdwg.mxu0
    %v283 = vxor.u32 %v208, 2147483648
    %v284 = vmul.f32 %v283, 1.442695
    %v285 = vpow.pop %v284
    %v286 = vadd.f32 %v285, 1.0
    %v287 = vrcp.pop %v286
    %v288 = vmul.f32 1.0, %v287
    %v289 = vxor.u32 %v210, 2147483648
    %v290 = vmul.f32 %v289, 1.442695
    %v291 = vpow.pop %v290
    %v292 = vadd.f32 %v291, 1.0
    %v293 = vrcp.pop %v292
    %v294 = vmul.f32 1.0, %v293
    %v295 = vtanh.pop %v279
    %v296 = vxor.u32 %v281, 2147483648
    %v297 = vmul.f32 %v296, 1.442695
    %v298 = vpow.pop %v297
    %v299 = vadd.f32 %v298, 1.0
    %v300 = vrcp.pop %v299
    %v301 = vmul.f32 1.0, %v300
    %v302 = vmul.f32 %v294, %v53
    %v303 = vmul.f32 %v288, %v295
    %v304 = vadd.f32 %v302, %v303
    %v305 = vtanh.pop %v304
    %v306 = vmul.f32 %v301, %v305
    %s307 = scalar_lea.vmem [#allocation5], 8
    %v308 = vld [vmem:[%s307] sm:$0xff]
    %v310 = vcombine.high %v308, %v308
    %v312 = vunpack.c.l.s4 1983009808
    %v313 = vunpack.c.0.s8 %v312
    %v314 = vlaneseq
    %v315 = vshrl.u32 %v314, 7
    %v316 = vsub.s32 %v313, %v315
    %v317 = vrot.slane %v308, %v316
    %v319 = vunpack.c.l.s4 1983009808
    %v320 = vunpack.c.0.s8 %v319
    %v321 = vlaneseq
    %v322 = vshrl.u32 %v321, 7
    %v323 = vsub.s32 %v320, %v322
    %v324 = vrot.slane %v310, %v323
    %v325 = vcombine.high %v317, %v317
    %v326 = vcombine.high %v324, %v324
    %331 = vmatprep.subr.mxu0 %v55
    %332 = vmatpush1.msra.mxu0 %v54
    %333 = vmatprep.subr.mxu0 %v59
    %334 = vmatpush1.msra.mxu0 %v58
    %335 = vmatprep.subr.mxu0 %v63
    %336 = vmatpush1.msra.mxu0 %v62
    %337 = vmatprep.subr.mxu0 %v67
    %338 = vmatpush1.msra.mxu0 %v66
    %339 = vmatprep.subr.mxu0 %v71
    %340 = vmatpush1.msra.mxu0 %v70
    %341 = vmatprep.subr.mxu0 %v75
    %342 = vmatpush1.msra.mxu0 %v74
    %343 = vmatprep.subr.mxu0 %v79
    %344 = vmatpush1.msra.mxu0 %v78
    %345 = vmatprep.subr.mxu0 %v83
    %346 = vmatpush1.msra.mxu0 %v82
    %347 = vmatprep.subr.mxu0 %v87
    %348 = vmatpush1.msra.mxu0 %v86
    %349 = vmatprep.subr.mxu0 %v91
    %350 = vmatpush1.msra.mxu0 %v90
    %351 = vmatprep.subr.mxu0 %v95
    %352 = vmatpush1.msra.mxu0 %v94
    %353 = vmatprep.subr.mxu0 %v99
    %354 = vmatpush1.msra.mxu0 %v98
    %355 = vmatprep.subr.mxu0 %v103
    %356 = vmatpush1.msra.mxu0 %v102
    %357 = vmatprep.subr.mxu0 %v107
    %358 = vmatpush1.msra.mxu0 %v106
    %359 = vmatprep.subr.mxu0 %v111
    %360 = vmatpush1.msra.mxu0 %v110
    %361 = vmatprep.subr.mxu0 %v115
    %362 = vmatpush1.msra.mxu0 %v114
    %363 = vmatprep.subr.mxu0 0.0
    %364 = vmatpush1.msra.mxu0 0.0
    %365 = vmatprep.subr.mxu0 0.0
    %366 = vmatpush1.msra.mxu0 0.0
    %367 = vmatprep.subr.mxu0 0.0
    %368 = vmatpush1.msra.mxu0 0.0
    %369 = vmatprep.subr.mxu0 0.0
    %370 = vmatpush1.msra.mxu0 0.0
    %371 = vmatprep.subr.mxu0 0.0
    %372 = vmatpush1.msra.mxu0 0.0
    %373 = vmatprep.subr.mxu0 0.0
    %374 = vmatpush1.msra.mxu0 0.0
    %375 = vmatprep.subr.mxu0 0.0
    %376 = vmatpush1.msra.mxu0 0.0
    %377 = vmatprep.subr.mxu0 0.0
    %378 = vmatpush1.msra.mxu0 0.0
    %379 = vmatprep.subr.mxu0 0.0
    %380 = vmatpush1.msra.mxu0 0.0
    %381 = vmatprep.subr.mxu0 0.0
    %382 = vmatpush1.msra.mxu0 0.0
    %383 = vmatprep.subr.mxu0 0.0
    %384 = vmatpush1.msra.mxu0 0.0
    %385 = vmatprep.subr.mxu0 0.0
    %386 = vmatpush1.msra.mxu0 0.0
    %387 = vmatprep.subr.mxu0 0.0
    %388 = vmatpush1.msra.mxu0 0.0
    %389 = vmatprep.subr.mxu0 0.0
    %390 = vmatpush1.msra.mxu0 0.0
    %391 = vmatprep.subr.mxu0 0.0
    %392 = vmatpush1.msra.mxu0 0.0
    %393 = vmatprep.subr.mxu0 0.0
    %394 = vmatpush1.msra.mxu0 0.0
    %395 = vmatprep.mubr.f32.mxu0 0.0
    %396 = vmatmul.mubr.f32.gmra.mrb[0].mxu0 %v306
    %v397 = vpop.f32.mrb[0].mxu0
    %v398 = vadd.f32 %v317, %v397
    %v399 = vpop.f32.mrb[0].mxu0
    %v400 = vadd.f32 %v325, %v399
    %401 = vdwg.mxu0
    %402 = vmatprep.subr.mxu0 %v57
    %403 = vmatpush1.msra.mxu0 %v56
    %404 = vmatprep.subr.mxu0 %v61
    %405 = vmatpush1.msra.mxu0 %v60
    %406 = vmatprep.subr.mxu0 %v65
    %407 = vmatpush1.msra.mxu0 %v64
    %408 = vmatprep.subr.mxu0 %v69
    %409 = vmatpush1.msra.mxu0 %v68
    %410 = vmatprep.subr.mxu0 %v73
    %411 = vmatpush1.msra.mxu0 %v72
    %412 = vmatprep.subr.mxu0 %v77
    %413 = vmatpush1.msra.mxu0 %v76
    %414 = vmatprep.subr.mxu0 %v81
    %415 = vmatpush1.msra.mxu0 %v80
    %416 = vmatprep.subr.mxu0 %v85
    %417 = vmatpush1.msra.mxu0 %v84
    %418 = vmatprep.subr.mxu0 %v89
    %419 = vmatpush1.msra.mxu0 %v88
    %420 = vmatprep.subr.mxu0 %v93
    %421 = vmatpush1.msra.mxu0 %v92
    %422 = vmatprep.subr.mxu0 %v97
    %423 = vmatpush1.msra.mxu0 %v96
    %424 = vmatprep.subr.mxu0 %v101
    %425 = vmatpush1.msra.mxu0 %v100
    %426 = vmatprep.subr.mxu0 %v105
    %427 = vmatpush1.msra.mxu0 %v104
    %428 = vmatprep.subr.mxu0 %v109
    %429 = vmatpush1.msra.mxu0 %v108
    %430 = vmatprep.subr.mxu0 %v113
    %431 = vmatpush1.msra.mxu0 %v112
    %432 = vmatprep.subr.mxu0 %v117
    %433 = vmatpush1.msra.mxu0 %v116
    %434 = vmatprep.subr.mxu0 0.0
    %435 = vmatpush1.msra.mxu0 0.0
    %436 = vmatprep.subr.mxu0 0.0
    %437 = vmatpush1.msra.mxu0 0.0
    %438 = vmatprep.subr.mxu0 0.0
    %439 = vmatpush1.msra.mxu0 0.0
    %440 = vmatprep.subr.mxu0 0.0
    %441 = vmatpush1.msra.mxu0 0.0
    %442 = vmatprep.subr.mxu0 0.0
    %443 = vmatpush1.msra.mxu0 0.0
    %444 = vmatprep.subr.mxu0 0.0
    %445 = vmatpush1.msra.mxu0 0.0
    %446 = vmatprep.subr.mxu0 0.0
    %447 = vmatpush1.msra.mxu0 0.0
    %448 = vmatprep.subr.mxu0 0.0
    %449 = vmatpush1.msra.mxu0 0.0
    %450 = vmatprep.subr.mxu0 0.0
    %451 = vmatpush1.msra.mxu0 0.0
    %452 = vmatprep.subr.mxu0 0.0
    %453 = vmatpush1.msra.mxu0 0.0
    %454 = vmatprep.subr.mxu0 0.0
    %455 = vmatpush1.msra.mxu0 0.0
    %456 = vmatprep.subr.mxu0 0.0
    %457 = vmatpush1.msra.mxu0 0.0
    %458 = vmatprep.subr.mxu0 0.0
    %459 = vmatpush1.msra.mxu0 0.0
    %460 = vmatprep.subr.mxu0 0.0
    %461 = vmatpush1.msra.mxu0 0.0
    %462 = vmatprep.subr.mxu0 0.0
    %463 = vmatpush1.msra.mxu0 0.0
    %464 = vmatprep.subr.mxu0 0.0
    %465 = vmatpush1.msra.mxu0 0.0
    %466 = vmatprep.mubr.f32.mxu0 0.0
    %467 = vmatmul.mubr.f32.gmra.mrb[0].mxu0 %v306
    %v468 = vpop.f32.mrb[0].mxu0
    %v469 = vadd.f32 %v324, %v468
    %v470 = vpop.f32.mrb[0].mxu0
    %v471 = vadd.f32 %v326, %v470
    %472 = vdwg.mxu0
    %v473 = vxor.u32 %v398, 2147483648
    %v474 = vmul.f32 %v473, 1.442695
    %v475 = vpow.pop %v474
    %v476 = vadd.f32 %v475, 1.0
    %v477 = vrcp.pop %v476
    %v478 = vmul.f32 1.0, %v477
    %v479 = vxor.u32 %v400, 2147483648
    %v480 = vmul.f32 %v479, 1.442695
    %v481 = vpow.pop %v480
    %v482 = vadd.f32 %v481, 1.0
    %v483 = vrcp.pop %v482
    %v484 = vmul.f32 1.0, %v483
    %v485 = vtanh.pop %v469
    %v486 = vxor.u32 %v471, 2147483648
    %v487 = vmul.f32 %v486, 1.442695
    %v488 = vpow.pop %v487
    %v489 = vadd.f32 %v488, 1.0
    %v490 = vrcp.pop %v489
    %v491 = vmul.f32 1.0, %v490
    %v492 = vmul.f32 %v484, %v304
    %v493 = vmul.f32 %v478, %v485
    %v494 = vadd.f32 %v492, %v493
    %v495 = vtanh.pop %v494
    %v496 = vmul.f32 %v491, %v495
    %s497 = scalar_lea.vmem [#allocation5], 16
    %v498 = vld [vmem:[%s497] sm:$0xff]
    %v500 = vcombine.high %v498, %v498
    %v502 = vunpack.c.l.s4 1983009808
    %v503 = vunpack.c.0.s8 %v502
    %v504 = vlaneseq
    %v505 = vshrl.u32 %v504, 7
    %v506 = vsub.s32 %v503, %v505
    %v507 = vrot.slane %v498, %v506
    %v509 = vunpack.c.l.s4 1983009808
    %v510 = vunpack.c.0.s8 %v509
    %v511 = vlaneseq
    %v512 = vshrl.u32 %v511, 7
    %v513 = vsub.s32 %v510, %v512
    %v514 = vrot.slane %v500, %v513
    %v515 = vcombine.high %v507, %v507
    %v516 = vcombine.high %v514, %v514
    %521 = vmatprep.subr.mxu0 %v55
    %522 = vmatpush1.msra.mxu0 %v54
    %523 = vmatprep.subr.mxu0 %v59
    %524 = vmatpush1.msra.mxu0 %v58
    %525 = vmatprep.subr.mxu0 %v63
    %526 = vmatpush1.msra.mxu0 %v62
    %527 = vmatprep.subr.mxu0 %v67
    %528 = vmatpush1.msra.mxu0 %v66
    %529 = vmatprep.subr.mxu0 %v71
    %530 = vmatpush1.msra.mxu0 %v70
    %531 = vmatprep.subr.mxu0 %v75
    %532 = vmatpush1.msra.mxu0 %v74
    %533 = vmatprep.subr.mxu0 %v79
    %534 = vmatpush1.msra.mxu0 %v78
    %535 = vmatprep.subr.mxu0 %v83
    %536 = vmatpush1.msra.mxu0 %v82
    %537 = vmatprep.subr.mxu0 %v87
    %538 = vmatpush1.msra.mxu0 %v86
    %539 = vmatprep.subr.mxu0 %v91
    %540 = vmatpush1.msra.mxu0 %v90
    %541 = vmatprep.subr.mxu0 %v95
    %542 = vmatpush1.msra.mxu0 %v94
    %543 = vmatprep.subr.mxu0 %v99
    %544 = vmatpush1.msra.mxu0 %v98
    %545 = vmatprep.subr.mxu0 %v103
    %546 = vmatpush1.msra.mxu0 %v102
    %547 = vmatprep.subr.mxu0 %v107
    %548 = vmatpush1.msra.mxu0 %v106
    %549 = vmatprep.subr.mxu0 %v111
    %550 = vmatpush1.msra.mxu0 %v110
    %551 = vmatprep.subr.mxu0 %v115
    %552 = vmatpush1.msra.mxu0 %v114
    %553 = vmatprep.subr.mxu0 0.0
    %554 = vmatpush1.msra.mxu0 0.0
    %555 = vmatprep.subr.mxu0 0.0
    %556 = vmatpush1.msra.mxu0 0.0
    %557 = vmatprep.subr.mxu0 0.0
    %558 = vmatpush1.msra.mxu0 0.0
    %559 = vmatprep.subr.mxu0 0.0
    %560 = vmatpush1.msra.mxu0 0.0
    %561 = vmatprep.subr.mxu0 0.0
    %562 = vmatpush1.msra.mxu0 0.0
    %563 = vmatprep.subr.mxu0 0.0
    %564 = vmatpush1.msra.mxu0 0.0
    %565 = vmatprep.subr.mxu0 0.0
    %566 = vmatpush1.msra.mxu0 0.0
    %567 = vmatprep.subr.mxu0 0.0
    %568 = vmatpush1.msra.mxu0 0.0
    %569 = vmatprep.subr.mxu0 0.0
    %570 = vmatpush1.msra.mxu0 0.0
    %571 = vmatprep.subr.mxu0 0.0
    %572 = vmatpush1.msra.mxu0 0.0
    %573 = vmatprep.subr.mxu0 0.0
    %574 = vmatpush1.msra.mxu0 0.0
    %575 = vmatprep.subr.mxu0 0.0
    %576 = vmatpush1.msra.mxu0 0.0
    %577 = vmatprep.subr.mxu0 0.0
    %578 = vmatpush1.msra.mxu0 0.0
    %579 = vmatprep.subr.mxu0 0.0
    %580 = vmatpush1.msra.mxu0 0.0
    %581 = vmatprep.subr.mxu0 0.0
    %582 = vmatpush1.msra.mxu0 0.0
    %583 = vmatprep.subr.mxu0 0.0
    %584 = vmatpush1.msra.mxu0 0.0
    %585 = vmatprep.mubr.f32.mxu0 0.0
    %586 = vmatmul.mubr.f32.gmra.mrb[0].mxu0 %v496
    %v587 = vpop.f32.mrb[0].mxu0
    %v588 = vadd.f32 %v507, %v587
    %v589 = vpop.f32.mrb[0].mxu0
    %v590 = vadd.f32 %v515, %v589
    %591 = vdwg.mxu0
    %592 = vmatprep.subr.mxu0 %v57
    %593 = vmatpush1.msra.mxu0 %v56
    %594 = vmatprep.subr.mxu0 %v61
    %595 = vmatpush1.msra.mxu0 %v60
    %596 = vmatprep.subr.mxu0 %v65
    %597 = vmatpush1.msra.mxu0 %v64
    %598 = vmatprep.subr.mxu0 %v69
    %599 = vmatpush1.msra.mxu0 %v68
    %600 = vmatprep.subr.mxu0 %v73
    %601 = vmatpush1.msra.mxu0 %v72
    %602 = vmatprep.subr.mxu0 %v77
    %603 = vmatpush1.msra.mxu0 %v76
    %604 = vmatprep.subr.mxu0 %v81
    %605 = vmatpush1.msra.mxu0 %v80
    %606 = vmatprep.subr.mxu0 %v85
    %607 = vmatpush1.msra.mxu0 %v84
    %608 = vmatprep.subr.mxu0 %v89
    %609 = vmatpush1.msra.mxu0 %v88
    %610 = vmatprep.subr.mxu0 %v93
    %611 = vmatpush1.msra.mxu0 %v92
    %612 = vmatprep.subr.mxu0 %v97
    %613 = vmatpush1.msra.mxu0 %v96
    %614 = vmatprep.subr.mxu0 %v101
    %615 = vmatpush1.msra.mxu0 %v100
    %616 = vmatprep.subr.mxu0 %v105
    %617 = vmatpush1.msra.mxu0 %v104
    %618 = vmatprep.subr.mxu0 %v109
    %619 = vmatpush1.msra.mxu0 %v108
    %620 = vmatprep.subr.mxu0 %v113
    %621 = vmatpush1.msra.mxu0 %v112
    %622 = vmatprep.subr.mxu0 %v117
    %623 = vmatpush1.msra.mxu0 %v116
    %624 = vmatprep.subr.mxu0 0.0
    %625 = vmatpush1.msra.mxu0 0.0
    %626 = vmatprep.subr.mxu0 0.0
    %627 = vmatpush1.msra.mxu0 0.0
    %628 = vmatprep.subr.mxu0 0.0
    %629 = vmatpush1.msra.mxu0 0.0
    %630 = vmatprep.subr.mxu0 0.0
    %631 = vmatpush1.msra.mxu0 0.0
    %632 = vmatprep.subr.mxu0 0.0
    %633 = vmatpush1.msra.mxu0 0.0
    %634 = vmatprep.subr.mxu0 0.0
    %635 = vmatpush1.msra.mxu0 0.0
    %636 = vmatprep.subr.mxu0 0.0
    %637 = vmatpush1.msra.mxu0 0.0
    %638 = vmatprep.subr.mxu0 0.0
    %639 = vmatpush1.msra.mxu0 0.0
    %640 = vmatprep.subr.mxu0 0.0
    %641 = vmatpush1.msra.mxu0 0.0
    %642 = vmatprep.subr.mxu0 0.0
    %643 = vmatpush1.msra.mxu0 0.0
    %644 = vmatprep.subr.mxu0 0.0
    %645 = vmatpush1.msra.mxu0 0.0
    %646 = vmatprep.subr.mxu0 0.0
    %647 = vmatpush1.msra.mxu0 0.0
    %648 = vmatprep.subr.mxu0 0.0
    %649 = vmatpush1.msra.mxu0 0.0
    %650 = vmatprep.subr.mxu0 0.0
    %651 = vmatpush1.msra.mxu0 0.0
    %652 = vmatprep.subr.mxu0 0.0
    %653 = vmatpush1.msra.mxu0 0.0
    %654 = vmatprep.subr.mxu0 0.0
    %655 = vmatpush1.msra.mxu0 0.0
    %656 = vmatprep.mubr.f32.mxu0 0.0
    %657 = vmatmul.mubr.f32.gmra.mrb[0].mxu0 %v496
    %v658 = vpop.f32.mrb[0].mxu0
    %v659 = vadd.f32 %v514, %v658
    %v660 = vpop.f32.mrb[0].mxu0
    %v661 = vadd.f32 %v516, %v660
    %662 = vdwg.mxu0
    %v663 = vxor.u32 %v588, 2147483648
    %v664 = vmul.f32 %v663, 1.442695
    %v665 = vpow.pop %v664
    %v666 = vadd.f32 %v665, 1.0
    %v667 = vrcp.pop %v666
    %v668 = vmul.f32 1.0, %v667
    %v669 = vxor.u32 %v590, 2147483648
    %v670 = vmul.f32 %v669, 1.442695
    %v671 = vpow.pop %v670
    %v672 = vadd.f32 %v671, 1.0
    %v673 = vrcp.pop %v672
    %v674 = vmul.f32 1.0, %v673
    %v675 = vtanh.pop %v659
    %v676 = vxor.u32 %v661, 2147483648
    %v677 = vmul.f32 %v676, 1.442695
    %v678 = vpow.pop %v677
    %v679 = vadd.f32 %v678, 1.0
    %v680 = vrcp.pop %v679
    %v681 = vmul.f32 1.0, %v680
    %v682 = vmul.f32 %v674, %v494
    %v683 = vmul.f32 %v668, %v675
    %v684 = vadd.f32 %v682, %v683
    %v685 = vtanh.pop %v684
    %v686 = vmul.f32 %v681, %v685
    %s687 = scalar_lea.vmem [#allocation5], 24
    %v688 = vld [vmem:[%s687] sm:$0xff]
    %v690 = vcombine.high %v688, %v688
    %v692 = vunpack.c.l.s4 1983009808
    %v693 = vunpack.c.0.s8 %v692
    %v694 = vlaneseq
    %v695 = vshrl.u32 %v694, 7
    %v696 = vsub.s32 %v693, %v695
    %v697 = vrot.slane %v688, %v696
    %v699 = vunpack.c.l.s4 1983009808
    %v700 = vunpack.c.0.s8 %v699
    %v701 = vlaneseq
    %v702 = vshrl.u32 %v701, 7
    %v703 = vsub.s32 %v700, %v702
    %v704 = vrot.slane %v690, %v703
    %v705 = vcombine.high %v697, %v697
    %v706 = vcombine.high %v704, %v704
    %711 = vmatprep.subr.mxu0 %v55
    %712 = vmatpush1.msra.mxu0 %v54
    %713 = vmatprep.subr.mxu0 %v59
    %714 = vmatpush1.msra.mxu0 %v58
    %715 = vmatprep.subr.mxu0 %v63
    %716 = vmatpush1.msra.mxu0 %v62
    %717 = vmatprep.subr.mxu0 %v67
    %718 = vmatpush1.msra.mxu0 %v66
    %719 = vmatprep.subr.mxu0 %v71
    %720 = vmatpush1.msra.mxu0 %v70
    %721 = vmatprep.subr.mxu0 %v75
    %722 = vmatpush1.msra.mxu0 %v74
    %723 = vmatprep.subr.mxu0 %v79
    %724 = vmatpush1.msra.mxu0 %v78
    %725 = vmatprep.subr.mxu0 %v83
    %726 = vmatpush1.msra.mxu0 %v82
    %727 = vmatprep.subr.mxu0 %v87
    %728 = vmatpush1.msra.mxu0 %v86
    %729 = vmatprep.subr.mxu0 %v91
    %730 = vmatpush1.msra.mxu0 %v90
    %731 = vmatprep.subr.mxu0 %v95
    %732 = vmatpush1.msra.mxu0 %v94
    %733 = vmatprep.subr.mxu0 %v99
    %734 = vmatpush1.msra.mxu0 %v98
    %735 = vmatprep.subr.mxu0 %v103
    %736 = vmatpush1.msra.mxu0 %v102
    %737 = vmatprep.subr.mxu0 %v107
    %738 = vmatpush1.msra.mxu0 %v106
    %739 = vmatprep.subr.mxu0 %v111
    %740 = vmatpush1.msra.mxu0 %v110
    %741 = vmatprep.subr.mxu0 %v115
    %742 = vmatpush1.msra.mxu0 %v114
    %743 = vmatprep.subr.mxu0 0.0
    %744 = vmatpush1.msra.mxu0 0.0
    %745 = vmatprep.subr.mxu0 0.0
    %746 = vmatpush1.msra.mxu0 0.0
    %747 = vmatprep.subr.mxu0 0.0
    %748 = vmatpush1.msra.mxu0 0.0
    %749 = vmatprep.subr.mxu0 0.0
    %750 = vmatpush1.msra.mxu0 0.0
    %751 = vmatprep.subr.mxu0 0.0
    %752 = vmatpush1.msra.mxu0 0.0
    %753 = vmatprep.subr.mxu0 0.0
    %754 = vmatpush1.msra.mxu0 0.0
    %755 = vmatprep.subr.mxu0 0.0
    %756 = vmatpush1.msra.mxu0 0.0
    %757 = vmatprep.subr.mxu0 0.0
    %758 = vmatpush1.msra.mxu0 0.0
    %759 = vmatprep.subr.mxu0 0.0
    %760 = vmatpush1.msra.mxu0 0.0
    %761 = vmatprep.subr.mxu0 0.0
    %762 = vmatpush1.msra.mxu0 0.0
    %763 = vmatprep.subr.mxu0 0.0
    %764 = vmatpush1.msra.mxu0 0.0
    %765 = vmatprep.subr.mxu0 0.0
    %766 = vmatpush1.msra.mxu0 0.0
    %767 = vmatprep.subr.mxu0 0.0
    %768 = vmatpush1.msra.mxu0 0.0
    %769 = vmatprep.subr.mxu0 0.0
    %770 = vmatpush1.msra.mxu0 0.0
    %771 = vmatprep.subr.mxu0 0.0
    %772 = vmatpush1.msra.mxu0 0.0
    %773 = vmatprep.subr.mxu0 0.0
    %774 = vmatpush1.msra.mxu0 0.0
    %775 = vmatprep.mubr.f32.mxu0 0.0
    %776 = vmatmul.mubr.f32.gmra.mrb[0].mxu0 %v686
    %v777 = vpop.f32.mrb[0].mxu0
    %v778 = vadd.f32 %v697, %v777
    %v779 = vpop.f32.mrb[0].mxu0
    %v780 = vadd.f32 %v705, %v779
    %781 = vdwg.mxu0
    %782 = vmatprep.subr.mxu0 %v57
    %783 = vmatpush1.msra.mxu0 %v56
    %784 = vmatprep.subr.mxu0 %v61
    %785 = vmatpush1.msra.mxu0 %v60
    %786 = vmatprep.subr.mxu0 %v65
    %787 = vmatpush1.msra.mxu0 %v64
    %788 = vmatprep.subr.mxu0 %v69
    %789 = vmatpush1.msra.mxu0 %v68
    %790 = vmatprep.subr.mxu0 %v73
    %791 = vmatpush1.msra.mxu0 %v72
    %792 = vmatprep.subr.mxu0 %v77
    %793 = vmatpush1.msra.mxu0 %v76
    %794 = vmatprep.subr.mxu0 %v81
    %795 = vmatpush1.msra.mxu0 %v80
    %796 = vmatprep.subr.mxu0 %v85
    %797 = vmatpush1.msra.mxu0 %v84
    %798 = vmatprep.subr.mxu0 %v89
    %799 = vmatpush1.msra.mxu0 %v88
    %800 = vmatprep.subr.mxu0 %v93
    %801 = vmatpush1.msra.mxu0 %v92
    %802 = vmatprep.subr.mxu0 %v97
    %803 = vmatpush1.msra.mxu0 %v96
    %804 = vmatprep.subr.mxu0 %v101
    %805 = vmatpush1.msra.mxu0 %v100
    %806 = vmatprep.subr.mxu0 %v105
    %807 = vmatpush1.msra.mxu0 %v104
    %808 = vmatprep.subr.mxu0 %v109
    %809 = vmatpush1.msra.mxu0 %v108
    %810 = vmatprep.subr.mxu0 %v113
    %811 = vmatpush1.msra.mxu0 %v112
    %812 = vmatprep.subr.mxu0 %v117
    %813 = vmatpush1.msra.mxu0 %v116
    %814 = vmatprep.subr.mxu0 0.0
    %815 = vmatpush1.msra.mxu0 0.0
    %816 = vmatprep.subr.mxu0 0.0
    %817 = vmatpush1.msra.mxu0 0.0
    %818 = vmatprep.subr.mxu0 0.0
    %819 = vmatpush1.msra.mxu0 0.0
    %820 = vmatprep.subr.mxu0 0.0
    %821 = vmatpush1.msra.mxu0 0.0
    %822 = vmatprep.subr.mxu0 0.0
    %823 = vmatpush1.msra.mxu0 0.0
    %824 = vmatprep.subr.mxu0 0.0
    %825 = vmatpush1.msra.mxu0 0.0
    %826 = vmatprep.subr.mxu0 0.0
    %827 = vmatpush1.msra.mxu0 0.0
    %828 = vmatprep.subr.mxu0 0.0
    %829 = vmatpush1.msra.mxu0 0.0
    %830 = vmatprep.subr.mxu0 0.0
    %831 = vmatpush1.msra.mxu0 0.0
    %832 = vmatprep.subr.mxu0 0.0
    %833 = vmatpush1.msra.mxu0 0.0
    %834 = vmatprep.subr.mxu0 0.0
    %835 = vmatpush1.msra.mxu0 0.0
    %836 = vmatprep.subr.mxu0 0.0
    %837 = vmatpush1.msra.mxu0 0.0
    %838 = vmatprep.subr.mxu0 0.0
    %839 = vmatpush1.msra.mxu0 0.0
    %840 = vmatprep.subr.mxu0 0.0
    %841 = vmatpush1.msra.mxu0 0.0
    %842 = vmatprep.subr.mxu0 0.0
    %843 = vmatpush1.msra.mxu0 0.0
    %844 = vmatprep.subr.mxu0 0.0
    %845 = vmatpush1.msra.mxu0 0.0
    %846 = vmatprep.mubr.f32.mxu0 0.0
    %847 = vmatmul.mubr.f32.gmra.mrb[0].mxu0 %v686
    %v848 = vpop.f32.mrb[0].mxu0
    %v849 = vadd.f32 %v704, %v848
    %v850 = vpop.f32.mrb[0].mxu0
    %v851 = vadd.f32 %v706, %v850
    %852 = vdwg.mxu0
    %v853 = vxor.u32 %v778, 2147483648
    %v854 = vmul.f32 %v853, 1.442695
    %v855 = vpow.pop %v854
    %v856 = vadd.f32 %v855, 1.0
    %v857 = vrcp.pop %v856
    %v858 = vmul.f32 1.0, %v857
    %v859 = vxor.u32 %v780, 2147483648
    %v860 = vmul.f32 %v859, 1.442695
    %v861 = vpow.pop %v860
    %v862 = vadd.f32 %v861, 1.0
    %v863 = vrcp.pop %v862
    %v864 = vmul.f32 1.0, %v863
    %v865 = vtanh.pop %v849
    %v866 = vxor.u32 %v851, 2147483648
    %v867 = vmul.f32 %v866, 1.442695
    %v868 = vpow.pop %v867
    %v869 = vadd.f32 %v868, 1.0
    %v870 = vrcp.pop %v869
    %v871 = vmul.f32 1.0, %v870
    %v872 = vmul.f32 %v864, %v684
    %v873 = vmul.f32 %v858, %v865
    %v874 = vadd.f32 %v872, %v873
    %v875 = vtanh.pop %v874
    %v876 = vmul.f32 %v871, %v875
    %s877 = scalar_lea.vmem [#allocation5], 32
    %v878 = vld [vmem:[%s877] sm:$0xff]
    %v880 = vcombine.high %v878, %v878
    %v882 = vunpack.c.l.s4 1983009808
    %v883 = vunpack.c.0.s8 %v882
    %v884 = vlaneseq
    %v885 = vshrl.u32 %v884, 7
    %v886 = vsub.s32 %v883, %v885
    %v887 = vrot.slane %v878, %v886
    %v889 = vunpack.c.l.s4 1983009808
    %v890 = vunpack.c.0.s8 %v889
    %v891 = vlaneseq
    %v892 = vshrl.u32 %v891, 7
    %v893 = vsub.s32 %v890, %v892
    %v894 = vrot.slane %v880, %v893
    %v895 = vcombine.high %v887, %v887
    %v896 = vcombine.high %v894, %v894
    %901 = vmatprep.subr.mxu0 %v55
    %902 = vmatpush1.msra.mxu0 %v54
    %903 = vmatprep.subr.mxu0 %v59
    %904 = vmatpush1.msra.mxu0 %v58
    %905 = vmatprep.subr.mxu0 %v63
    %906 = vmatpush1.msra.mxu0 %v62
    %907 = vmatprep.subr.mxu0 %v67
    %908 = vmatpush1.msra.mxu0 %v66
    %909 = vmatprep.subr.mxu0 %v71
    %910 = vmatpush1.msra.mxu0 %v70
    %911 = vmatprep.subr.mxu0 %v75
    %912 = vmatpush1.msra.mxu0 %v74
    %913 = vmatprep.subr.mxu0 %v79
    %914 = vmatpush1.msra.mxu0 %v78
    %915 = vmatprep.subr.mxu0 %v83
    %916 = vmatpush1.msra.mxu0 %v82
    %917 = vmatprep.subr.mxu0 %v87
    %918 = vmatpush1.msra.mxu0 %v86
    %919 = vmatprep.subr.mxu0 %v91
    %920 = vmatpush1.msra.mxu0 %v90
    %921 = vmatprep.subr.mxu0 %v95
    %922 = vmatpush1.msra.mxu0 %v94
    %923 = vmatprep.subr.mxu0 %v99
    %924 = vmatpush1.msra.mxu0 %v98
    %925 = vmatprep.subr.mxu0 %v103
    %926 = vmatpush1.msra.mxu0 %v102
    %927 = vmatprep.subr.mxu0 %v107
    %928 = vmatpush1.msra.mxu0 %v106
    %929 = vmatprep.subr.mxu0 %v111
    %930 = vmatpush1.msra.mxu0 %v110
    %931 = vmatprep.subr.mxu0 %v115
    %932 = vmatpush1.msra.mxu0 %v114
    %933 = vmatprep.subr.mxu0 0.0
    %934 = vmatpush1.msra.mxu0 0.0
    %935 = vmatprep.subr.mxu0 0.0
    %936 = vmatpush1.msra.mxu0 0.0
    %937 = vmatprep.subr.mxu0 0.0
    %938 = vmatpush1.msra.mxu0 0.0
    %939 = vmatprep.subr.mxu0 0.0
    %940 = vmatpush1.msra.mxu0 0.0
    %941 = vmatprep.subr.mxu0 0.0
    %942 = vmatpush1.msra.mxu0 0.0
    %943 = vmatprep.subr.mxu0 0.0
    %944 = vmatpush1.msra.mxu0 0.0
    %945 = vmatprep.subr.mxu0 0.0
    %946 = vmatpush1.msra.mxu0 0.0
    %947 = vmatprep.subr.mxu0 0.0
    %948 = vmatpush1.msra.mxu0 0.0
    %949 = vmatprep.subr.mxu0 0.0
    %950 = vmatpush1.msra.mxu0 0.0
    %951 = vmatprep.subr.mxu0 0.0
    %952 = vmatpush1.msra.mxu0 0.0
    %953 = vmatprep.subr.mxu0 0.0
    %954 = vmatpush1.msra.mxu0 0.0
    %955 = vmatprep.subr.mxu0 0.0
    %956 = vmatpush1.msra.mxu0 0.0
    %957 = vmatprep.subr.mxu0 0.0
    %958 = vmatpush1.msra.mxu0 0.0
    %959 = vmatprep.subr.mxu0 0.0
    %960 = vmatpush1.msra.mxu0 0.0
    %961 = vmatprep.subr.mxu0 0.0
    %962 = vmatpush1.msra.mxu0 0.0
    %963 = vmatprep.subr.mxu0 0.0
    %964 = vmatpush1.msra.mxu0 0.0
    %965 = vmatprep.mubr.f32.mxu0 0.0
    %966 = vmatmul.mubr.f32.gmra.mrb[0].mxu0 %v876
    %v967 = vpop.f32.mrb[0].mxu0
    %v968 = vadd.f32 %v887, %v967
    %v969 = vpop.f32.mrb[0].mxu0
    %v970 = vadd.f32 %v895, %v969
    %971 = vdwg.mxu0
    %972 = vmatprep.subr.mxu0 %v57
    %973 = vmatpush1.msra.mxu0 %v56
    %974 = vmatprep.subr.mxu0 %v61
    %975 = vmatpush1.msra.mxu0 %v60
    %976 = vmatprep.subr.mxu0 %v65
    %977 = vmatpush1.msra.mxu0 %v64
    %978 = vmatprep.subr.mxu0 %v69
    %979 = vmatpush1.msra.mxu0 %v68
    %980 = vmatprep.subr.mxu0 %v73
    %981 = vmatpush1.msra.mxu0 %v72
    %982 = vmatprep.subr.mxu0 %v77
    %983 = vmatpush1.msra.mxu0 %v76
    %984 = vmatprep.subr.mxu0 %v81
    %985 = vmatpush1.msra.mxu0 %v80
    %986 = vmatprep.subr.mxu0 %v85
    %987 = vmatpush1.msra.mxu0 %v84
    %988 = vmatprep.subr.mxu0 %v89
    %989 = vmatpush1.msra.mxu0 %v88
    %990 = vmatprep.subr.mxu0 %v93
    %991 = vmatpush1.msra.mxu0 %v92
    %992 = vmatprep.subr.mxu0 %v97
    %993 = vmatpush1.msra.mxu0 %v96
    %994 = vmatprep.subr.mxu0 %v101
    %995 = vmatpush1.msra.mxu0 %v100
    %996 = vmatprep.subr.mxu0 %v105
    %997 = vmatpush1.msra.mxu0 %v104
    %998 = vmatprep.subr.mxu0 %v109
    %999 = vmatpush1.msra.mxu0 %v108
    %1000 = vmatprep.subr.mxu0 %v113
    %1001 = vmatpush1.msra.mxu0 %v112
    %1002 = vmatprep.subr.mxu0 %v117
    %1003 = vmatpush1.msra.mxu0 %v116
    %1004 = vmatprep.subr.mxu0 0.0
    %1005 = vmatpush1.msra.mxu0 0.0
    %1006 = vmatprep.subr.mxu0 0.0
    %1007 = vmatpush1.msra.mxu0 0.0
    %1008 = vmatprep.subr.mxu0 0.0
    %1009 = vmatpush1.msra.mxu0 0.0
    %1010 = vmatprep.subr.mxu0 0.0
    %1011 = vmatpush1.msra.mxu0 0.0
    %1012 = vmatprep.subr.mxu0 0.0
    %1013 = vmatpush1.msra.mxu0 0.0
    %1014 = vmatprep.subr.mxu0 0.0
    %1015 = vmatpush1.msra.mxu0 0.0
    %1016 = vmatprep.subr.mxu0 0.0
    %1017 = vmatpush1.msra.mxu0 0.0
    %1018 = vmatprep.subr.mxu0 0.0
    %1019 = vmatpush1.msra.mxu0 0.0
    %1020 = vmatprep.subr.mxu0 0.0
    %1021 = vmatpush1.msra.mxu0 0.0
    %1022 = vmatprep.subr.mxu0 0.0
    %1023 = vmatpush1.msra.mxu0 0.0
    %1024 = vmatprep.subr.mxu0 0.0
    %1025 = vmatpush1.msra.mxu0 0.0
    %1026 = vmatprep.subr.mxu0 0.0
    %1027 = vmatpush1.msra.mxu0 0.0
    %1028 = vmatprep.subr.mxu0 0.0
    %1029 = vmatpush1.msra.mxu0 0.0
    %1030 = vmatprep.subr.mxu0 0.0
    %1031 = vmatpush1.msra.mxu0 0.0
    %1032 = vmatprep.subr.mxu0 0.0
    %1033 = vmatpush1.msra.mxu0 0.0
    %1034 = vmatprep.subr.mxu0 0.0
    %1035 = vmatpush1.msra.mxu0 0.0
    %1036 = vmatprep.mubr.f32.mxu0 0.0
    %1037 = vmatmul.mubr.f32.gmra.mrb[0].mxu0 %v876
    %v1038 = vpop.f32.mrb[0].mxu0
    %v1039 = vadd.f32 %v894, %v1038
    %v1040 = vpop.f32.mrb[0].mxu0
    %v1041 = vadd.f32 %v896, %v1040
    %1042 = vdwg.mxu0
    %v1043 = vxor.u32 %v968, 2147483648
    %v1044 = vmul.f32 %v1043, 1.442695
    %v1045 = vpow.pop %v1044
    %v1046 = vadd.f32 %v1045, 1.0
    %v1047 = vrcp.pop %v1046
    %v1048 = vmul.f32 1.0, %v1047
    %v1049 = vxor.u32 %v970, 2147483648
    %v1050 = vmul.f32 %v1049, 1.442695
    %v1051 = vpow.pop %v1050
    %v1052 = vadd.f32 %v1051, 1.0
    %v1053 = vrcp.pop %v1052
    %v1054 = vmul.f32 1.0, %v1053
    %v1055 = vtanh.pop %v1039
    %v1056 = vxor.u32 %v1041, 2147483648
    %v1057 = vmul.f32 %v1056, 1.442695
    %v1058 = vpow.pop %v1057
    %v1059 = vadd.f32 %v1058, 1.0
    %v1060 = vrcp.pop %v1059
    %v1061 = vmul.f32 1.0, %v1060
    %v1062 = vmul.f32 %v1054, %v874
    %v1063 = vmul.f32 %v1048, %v1055
    %v1064 = vadd.f32 %v1062, %v1063
    %v1065 = vtanh.pop %v1064
    %v1066 = vmul.f32 %v1061, %v1065
    %s1067 = scalar_lea.vmem [#allocation5], 40
    %v1068 = vld [vmem:[%s1067] sm:$0xff]
    %v1070 = vcombine.high %v1068, %v1068
    %v1072 = vunpack.c.l.s4 1983009808
    %v1073 = vunpack.c.0.s8 %v1072
    %v1074 = vlaneseq
    %v1075 = vshrl.u32 %v1074, 7
    %v1076 = vsub.s32 %v1073, %v1075
    %v1077 = vrot.slane %v1068, %v1076
    %v1079 = vunpack.c.l.s4 1983009808
    %v1080 = vunpack.c.0.s8 %v1079
    %v1081 = vlaneseq
    %v1082 = vshrl.u32 %v1081, 7
    %v1083 = vsub.s32 %v1080, %v1082
    %v1084 = vrot.slane %v1070, %v1083
    %v1085 = vcombine.high %v1077, %v1077
    %v1086 = vcombine.high %v1084, %v1084
    %1091 = vmatprep.subr.mxu0 %v55
    %1092 = vmatpush1.msra.mxu0 %v54
    %1093 = vmatprep.subr.mxu0 %v59
    %1094 = vmatpush1.msra.mxu0 %v58
    %1095 = vmatprep.subr.mxu0 %v63
    %1096 = vmatpush1.msra.mxu0 %v62
    %1097 = vmatprep.subr.mxu0 %v67
    %1098 = vmatpush1.msra.mxu0 %v66
    %1099 = vmatprep.subr.mxu0 %v71
    %1100 = vmatpush1.msra.mxu0 %v70
    %1101 = vmatprep.subr.mxu0 %v75
    %1102 = vmatpush1.msra.mxu0 %v74
    %1103 = vmatprep.subr.mxu0 %v79
    %1104 = vmatpush1.msra.mxu0 %v78
    %1105 = vmatprep.subr.mxu0 %v83
    %1106 = vmatpush1.msra.mxu0 %v82
    %1107 = vmatprep.subr.mxu0 %v87
    %1108 = vmatpush1.msra.mxu0 %v86
    %1109 = vmatprep.subr.mxu0 %v91
    %1110 = vmatpush1.msra.mxu0 %v90
    %1111 = vmatprep.subr.mxu0 %v95
    %1112 = vmatpush1.msra.mxu0 %v94
    %1113 = vmatprep.subr.mxu0 %v99
    %1114 = vmatpush1.msra.mxu0 %v98
    %1115 = vmatprep.subr.mxu0 %v103
    %1116 = vmatpush1.msra.mxu0 %v102
    %1117 = vmatprep.subr.mxu0 %v107
    %1118 = vmatpush1.msra.mxu0 %v106
    %1119 = vmatprep.subr.mxu0 %v111
    %1120 = vmatpush1.msra.mxu0 %v110
    %1121 = vmatprep.subr.mxu0 %v115
    %1122 = vmatpush1.msra.mxu0 %v114
    %1123 = vmatprep.subr.mxu0 0.0
    %1124 = vmatpush1.msra.mxu0 0.0
    %1125 = vmatprep.subr.mxu0 0.0
    %1126 = vmatpush1.msra.mxu0 0.0
    %1127 = vmatprep.subr.mxu0 0.0
    %1128 = vmatpush1.msra.mxu0 0.0
    %1129 = vmatprep.subr.mxu0 0.0
    %1130 = vmatpush1.msra.mxu0 0.0
    %1131 = vmatprep.subr.mxu0 0.0
    %1132 = vmatpush1.msra.mxu0 0.0
    %1133 = vmatprep.subr.mxu0 0.0
    %1134 = vmatpush1.msra.mxu0 0.0
    %1135 = vmatprep.subr.mxu0 0.0
    %1136 = vmatpush1.msra.mxu0 0.0
    %1137 = vmatprep.subr.mxu0 0.0
    %1138 = vmatpush1.msra.mxu0 0.0
    %1139 = vmatprep.subr.mxu0 0.0
    %1140 = vmatpush1.msra.mxu0 0.0
    %1141 = vmatprep.subr.mxu0 0.0
    %1142 = vmatpush1.msra.mxu0 0.0
    %1143 = vmatprep.subr.mxu0 0.0
    %1144 = vmatpush1.msra.mxu0 0.0
    %1145 = vmatprep.subr.mxu0 0.0
    %1146 = vmatpush1.msra.mxu0 0.0
    %1147 = vmatprep.subr.mxu0 0.0
    %1148 = vmatpush1.msra.mxu0 0.0
    %1149 = vmatprep.subr.mxu0 0.0
    %1150 = vmatpush1.msra.mxu0 0.0
    %1151 = vmatprep.subr.mxu0 0.0
    %1152 = vmatpush1.msra.mxu0 0.0
    %1153 = vmatprep.subr.mxu0 0.0
    %1154 = vmatpush1.msra.mxu0 0.0
    %1155 = vmatprep.mubr.f32.mxu0 0.0
    %1156 = vmatmul.mubr.f32.gmra.mrb[0].mxu0 %v1066
    %v1157 = vpop.f32.mrb[0].mxu0
    %v1158 = vadd.f32 %v1077, %v1157
    %v1159 = vpop.f32.mrb[0].mxu0
    %v1160 = vadd.f32 %v1085, %v1159
    %1161 = vdwg.mxu0
    %1162 = vmatprep.subr.mxu0 %v57
    %1163 = vmatpush1.msra.mxu0 %v56
    %1164 = vmatprep.subr.mxu0 %v61
    %1165 = vmatpush1.msra.mxu0 %v60
    %1166 = vmatprep.subr.mxu0 %v65
    %1167 = vmatpush1.msra.mxu0 %v64
    %1168 = vmatprep.subr.mxu0 %v69
    %1169 = vmatpush1.msra.mxu0 %v68
    %1170 = vmatprep.subr.mxu0 %v73
    %1171 = vmatpush1.msra.mxu0 %v72
    %1172 = vmatprep.subr.mxu0 %v77
    %1173 = vmatpush1.msra.mxu0 %v76
    %1174 = vmatprep.subr.mxu0 %v81
    %1175 = vmatpush1.msra.mxu0 %v80
    %1176 = vmatprep.subr.mxu0 %v85
    %1177 = vmatpush1.msra.mxu0 %v84
    %1178 = vmatprep.subr.mxu0 %v89
    %1179 = vmatpush1.msra.mxu0 %v88
    %1180 = vmatprep.subr.mxu0 %v93
    %1181 = vmatpush1.msra.mxu0 %v92
    %1182 = vmatprep.subr.mxu0 %v97
    %1183 = vmatpush1.msra.mxu0 %v96
    %1184 = vmatprep.subr.mxu0 %v101
    %1185 = vmatpush1.msra.mxu0 %v100
    %1186 = vmatprep.subr.mxu0 %v105
    %1187 = vmatpush1.msra.mxu0 %v104
    %1188 = vmatprep.subr.mxu0 %v109
    %1189 = vmatpush1.msra.mxu0 %v108
    %1190 = vmatprep.subr.mxu0 %v113
    %1191 = vmatpush1.msra.mxu0 %v112
    %1192 = vmatprep.subr.mxu0 %v117
    %1193 = vmatpush1.msra.mxu0 %v116
    %1194 = vmatprep.subr.mxu0 0.0
    %1195 = vmatpush1.msra.mxu0 0.0
    %1196 = vmatprep.subr.mxu0 0.0
    %1197 = vmatpush1.msra.mxu0 0.0
    %1198 = vmatprep.subr.mxu0 0.0
    %1199 = vmatpush1.msra.mxu0 0.0
    %1200 = vmatprep.subr.mxu0 0.0
    %1201 = vmatpush1.msra.mxu0 0.0
    %1202 = vmatprep.subr.mxu0 0.0
    %1203 = vmatpush1.msra.mxu0 0.0
    %1204 = vmatprep.subr.mxu0 0.0
    %1205 = vmatpush1.msra.mxu0 0.0
    %1206 = vmatprep.subr.mxu0 0.0
    %1207 = vmatpush1.msra.mxu0 0.0
    %1208 = vmatprep.subr.mxu0 0.0
    %1209 = vmatpush1.msra.mxu0 0.0
    %1210 = vmatprep.subr.mxu0 0.0
    %1211 = vmatpush1.msra.mxu0 0.0
    %1212 = vmatprep.subr.mxu0 0.0
    %1213 = vmatpush1.msra.mxu0 0.0
    %1214 = vmatprep.subr.mxu0 0.0
    %1215 = vmatpush1.msra.mxu0 0.0
    %1216 = vmatprep.subr.mxu0 0.0
    %1217 = vmatpush1.msra.mxu0 0.0
    %1218 = vmatprep.subr.mxu0 0.0
    %1219 = vmatpush1.msra.mxu0 0.0
    %1220 = vmatprep.subr.mxu0 0.0
    %1221 = vmatpush1.msra.mxu0 0.0
    %1222 = vmatprep.subr.mxu0 0.0
    %1223 = vmatpush1.msra.mxu0 0.0
    %1224 = vmatprep.subr.mxu0 0.0
    %1225 = vmatpush1.msra.mxu0 0.0
    %1226 = vmatprep.mubr.f32.mxu0 0.0
    %1227 = vmatmul.mubr.f32.gmra.mrb[0].mxu0 %v1066
    %v1228 = vpop.f32.mrb[0].mxu0
    %v1229 = vadd.f32 %v1084, %v1228
    %v1230 = vpop.f32.mrb[0].mxu0
    %v1231 = vadd.f32 %v1086, %v1230
    %1232 = vdwg.mxu0
    %v1233 = vxor.u32 %v1158, 2147483648
    %v1234 = vmul.f32 %v1233, 1.442695
    %v1235 = vpow.pop %v1234
    %v1236 = vadd.f32 %v1235, 1.0
    %v1237 = vrcp.pop %v1236
    %v1238 = vmul.f32 1.0, %v1237
    %v1239 = vxor.u32 %v1160, 2147483648
    %v1240 = vmul.f32 %v1239, 1.442695
    %v1241 = vpow.pop %v1240
    %v1242 = vadd.f32 %v1241, 1.0
    %v1243 = vrcp.pop %v1242
    %v1244 = vmul.f32 1.0, %v1243
    %v1245 = vtanh.pop %v1229
    %v1246 = vxor.u32 %v1231, 2147483648
    %v1247 = vmul.f32 %v1246, 1.442695
    %v1248 = vpow.pop %v1247
    %v1249 = vadd.f32 %v1248, 1.0
    %v1250 = vrcp.pop %v1249
    %v1251 = vmul.f32 1.0, %v1250
    %v1252 = vmul.f32 %v1244, %v1064
    %v1253 = vmul.f32 %v1238, %v1245
    %v1254 = vadd.f32 %v1252, %v1253
    %v1255 = vtanh.pop %v1254
    %v1256 = vmul.f32 %v1251, %v1255
    %s1257 = scalar_lea.vmem [#allocation5], 48
    %v1258 = vld [vmem:[%s1257] sm:$0xff]
    %v1260 = vcombine.high %v1258, %v1258
    %v1262 = vunpack.c.l.s4 1983009808
    %v1263 = vunpack.c.0.s8 %v1262
    %v1264 = vlaneseq
    %v1265 = vshrl.u32 %v1264, 7
    %v1266 = vsub.s32 %v1263, %v1265
    %v1267 = vrot.slane %v1258, %v1266
    %v1269 = vunpack.c.l.s4 1983009808
    %v1270 = vunpack.c.0.s8 %v1269
    %v1271 = vlaneseq
    %v1272 = vshrl.u32 %v1271, 7
    %v1273 = vsub.s32 %v1270, %v1272
    %v1274 = vrot.slane %v1260, %v1273
    %v1275 = vcombine.high %v1267, %v1267
    %v1276 = vcombine.high %v1274, %v1274
    %1281 = vmatprep.subr.mxu0 %v55
    %1282 = vmatpush1.msra.mxu0 %v54
    %1283 = vmatprep.subr.mxu0 %v59
    %1284 = vmatpush1.msra.mxu0 %v58
    %1285 = vmatprep.subr.mxu0 %v63
    %1286 = vmatpush1.msra.mxu0 %v62
    %1287 = vmatprep.subr.mxu0 %v67
    %1288 = vmatpush1.msra.mxu0 %v66
    %1289 = vmatprep.subr.mxu0 %v71
    %1290 = vmatpush1.msra.mxu0 %v70
    %1291 = vmatprep.subr.mxu0 %v75
    %1292 = vmatpush1.msra.mxu0 %v74
    %1293 = vmatprep.subr.mxu0 %v79
    %1294 = vmatpush1.msra.mxu0 %v78
    %1295 = vmatprep.subr.mxu0 %v83
    %1296 = vmatpush1.msra.mxu0 %v82
    %1297 = vmatprep.subr.mxu0 %v87
    %1298 = vmatpush1.msra.mxu0 %v86
    %1299 = vmatprep.subr.mxu0 %v91
    %1300 = vmatpush1.msra.mxu0 %v90
    %1301 = vmatprep.subr.mxu0 %v95
    %1302 = vmatpush1.msra.mxu0 %v94
    %1303 = vmatprep.subr.mxu0 %v99
    %1304 = vmatpush1.msra.mxu0 %v98
    %1305 = vmatprep.subr.mxu0 %v103
    %1306 = vmatpush1.msra.mxu0 %v102
    %1307 = vmatprep.subr.mxu0 %v107
    %1308 = vmatpush1.msra.mxu0 %v106
    %1309 = vmatprep.subr.mxu0 %v111
    %1310 = vmatpush1.msra.mxu0 %v110
    %1311 = vmatprep.subr.mxu0 %v115
    %1312 = vmatpush1.msra.mxu0 %v114
    %1313 = vmatprep.subr.mxu0 0.0
    %1314 = vmatpush1.msra.mxu0 0.0
    %1315 = vmatprep.subr.mxu0 0.0
    %1316 = vmatpush1.msra.mxu0 0.0
    %1317 = vmatprep.subr.mxu0 0.0
    %1318 = vmatpush1.msra.mxu0 0.0
    %1319 = vmatprep.subr.mxu0 0.0
    %1320 = vmatpush1.msra.mxu0 0.0
    %1321 = vmatprep.subr.mxu0 0.0
    %1322 = vmatpush1.msra.mxu0 0.0
    %1323 = vmatprep.subr.mxu0 0.0
    %1324 = vmatpush1.msra.mxu0 0.0
    %1325 = vmatprep.subr.mxu0 0.0
    %1326 = vmatpush1.msra.mxu0 0.0
    %1327 = vmatprep.subr.mxu0 0.0
    %1328 = vmatpush1.msra.mxu0 0.0
    %1329 = vmatprep.subr.mxu0 0.0
    %1330 = vmatpush1.msra.mxu0 0.0
    %1331 = vmatprep.subr.mxu0 0.0
    %1332 = vmatpush1.msra.mxu0 0.0
    %1333 = vmatprep.subr.mxu0 0.0
    %1334 = vmatpush1.msra.mxu0 0.0
    %1335 = vmatprep.subr.mxu0 0.0
    %1336 = vmatpush1.msra.mxu0 0.0
    %1337 = vmatprep.subr.mxu0 0.0
    %1338 = vmatpush1.msra.mxu0 0.0
    %1339 = vmatprep.subr.mxu0 0.0
    %1340 = vmatpush1.msra.mxu0 0.0
    %1341 = vmatprep.subr.mxu0 0.0
    %1342 = vmatpush1.msra.mxu0 0.0
    %1343 = vmatprep.subr.mxu0 0.0
    %1344 = vmatpush1.msra.mxu0 0.0
    %1345 = vmatprep.mubr.f32.mxu0 0.0
    %1346 = vmatmul.mubr.f32.gmra.mrb[0].mxu0 %v1256
    %v1347 = vpop.f32.mrb[0].mxu0
    %v1348 = vadd.f32 %v1267, %v1347
    %v1349 = vpop.f32.mrb[0].mxu0
    %v1350 = vadd.f32 %v1275, %v1349
    %1351 = vdwg.mxu0
    %1352 = vmatprep.subr.mxu0 %v57
    %1353 = vmatpush1.msra.mxu0 %v56
    %1354 = vmatprep.subr.mxu0 %v61
    %1355 = vmatpush1.msra.mxu0 %v60
    %1356 = vmatprep.subr.mxu0 %v65
    %1357 = vmatpush1.msra.mxu0 %v64
    %1358 = vmatprep.subr.mxu0 %v69
    %1359 = vmatpush1.msra.mxu0 %v68
    %1360 = vmatprep.subr.mxu0 %v73
    %1361 = vmatpush1.msra.mxu0 %v72
    %1362 = vmatprep.subr.mxu0 %v77
    %1363 = vmatpush1.msra.mxu0 %v76
    %1364 = vmatprep.subr.mxu0 %v81
    %1365 = vmatpush1.msra.mxu0 %v80
    %1366 = vmatprep.subr.mxu0 %v85
    %1367 = vmatpush1.msra.mxu0 %v84
    %1368 = vmatprep.subr.mxu0 %v89
    %1369 = vmatpush1.msra.mxu0 %v88
    %1370 = vmatprep.subr.mxu0 %v93
    %1371 = vmatpush1.msra.mxu0 %v92
    %1372 = vmatprep.subr.mxu0 %v97
    %1373 = vmatpush1.msra.mxu0 %v96
    %1374 = vmatprep.subr.mxu0 %v101
    %1375 = vmatpush1.msra.mxu0 %v100
    %1376 = vmatprep.subr.mxu0 %v105
    %1377 = vmatpush1.msra.mxu0 %v104
    %1378 = vmatprep.subr.mxu0 %v109
    %1379 = vmatpush1.msra.mxu0 %v108
    %1380 = vmatprep.subr.mxu0 %v113
    %1381 = vmatpush1.msra.mxu0 %v112
    %1382 = vmatprep.subr.mxu0 %v117
    %1383 = vmatpush1.msra.mxu0 %v116
    %1384 = vmatprep.subr.mxu0 0.0
    %1385 = vmatpush1.msra.mxu0 0.0
    %1386 = vmatprep.subr.mxu0 0.0
    %1387 = vmatpush1.msra.mxu0 0.0
    %1388 = vmatprep.subr.mxu0 0.0
    %1389 = vmatpush1.msra.mxu0 0.0
    %1390 = vmatprep.subr.mxu0 0.0
    %1391 = vmatpush1.msra.mxu0 0.0
    %1392 = vmatprep.subr.mxu0 0.0
    %1393 = vmatpush1.msra.mxu0 0.0
    %1394 = vmatprep.subr.mxu0 0.0
    %1395 = vmatpush1.msra.mxu0 0.0
    %1396 = vmatprep.subr.mxu0 0.0
    %1397 = vmatpush1.msra.mxu0 0.0
    %1398 = vmatprep.subr.mxu0 0.0
    %1399 = vmatpush1.msra.mxu0 0.0
    %1400 = vmatprep.subr.mxu0 0.0
    %1401 = vmatpush1.msra.mxu0 0.0
    %1402 = vmatprep.subr.mxu0 0.0
    %1403 = vmatpush1.msra.mxu0 0.0
    %1404 = vmatprep.subr.mxu0 0.0
    %1405 = vmatpush1.msra.mxu0 0.0
    %1406 = vmatprep.subr.mxu0 0.0
    %1407 = vmatpush1.msra.mxu0 0.0
    %1408 = vmatprep.subr.mxu0 0.0
    %1409 = vmatpush1.msra.mxu0 0.0
    %1410 = vmatprep.subr.mxu0 0.0
    %1411 = vmatpush1.msra.mxu0 0.0
    %1412 = vmatprep.subr.mxu0 0.0
    %1413 = vmatpush1.msra.mxu0 0.0
    %1414 = vmatprep.subr.mxu0 0.0
    %1415 = vmatpush1.msra.mxu0 0.0
    %1416 = vmatprep.mubr.f32.mxu0 0.0
    %1417 = vmatmul.mubr.f32.gmra.mrb[0].mxu0 %v1256
    %v1418 = vpop.f32.mrb[0].mxu0
    %v1419 = vadd.f32 %v1274, %v1418
    %v1420 = vpop.f32.mrb[0].mxu0
    %v1421 = vadd.f32 %v1276, %v1420
    %1422 = vdwg.mxu0
    %v1423 = vxor.u32 %v1348, 2147483648
    %v1424 = vmul.f32 %v1423, 1.442695
    %v1425 = vpow.pop %v1424
    %v1426 = vadd.f32 %v1425, 1.0
    %v1427 = vrcp.pop %v1426
    %v1428 = vmul.f32 1.0, %v1427
    %v1429 = vxor.u32 %v1350, 2147483648
    %v1430 = vmul.f32 %v1429, 1.442695
    %v1431 = vpow.pop %v1430
    %v1432 = vadd.f32 %v1431, 1.0
    %v1433 = vrcp.pop %v1432
    %v1434 = vmul.f32 1.0, %v1433
    %v1435 = vtanh.pop %v1419
    %v1436 = vxor.u32 %v1421, 2147483648
    %v1437 = vmul.f32 %v1436, 1.442695
    %v1438 = vpow.pop %v1437
    %v1439 = vadd.f32 %v1438, 1.0
    %v1440 = vrcp.pop %v1439
    %v1441 = vmul.f32 1.0, %v1440
    %v1442 = vmul.f32 %v1434, %v1254
    %v1443 = vmul.f32 %v1428, %v1435
    %v1444 = vadd.f32 %v1442, %v1443
    %v1445 = vtanh.pop %v1444
    %v1446 = vmul.f32 %v1441, %v1445
    %s1447 = scalar_lea.vmem [#allocation5], 56
    %v1448 = vld [vmem:[%s1447] sm:$0xff]
    %v1450 = vcombine.high %v1448, %v1448
    %v1452 = vunpack.c.l.s4 1983009808
    %v1453 = vunpack.c.0.s8 %v1452
    %v1454 = vlaneseq
    %v1455 = vshrl.u32 %v1454, 7
    %v1456 = vsub.s32 %v1453, %v1455
    %v1457 = vrot.slane %v1448, %v1456
    %v1459 = vunpack.c.l.s4 1983009808
    %v1460 = vunpack.c.0.s8 %v1459
    %v1461 = vlaneseq
    %v1462 = vshrl.u32 %v1461, 7
    %v1463 = vsub.s32 %v1460, %v1462
    %v1464 = vrot.slane %v1450, %v1463
    %v1465 = vcombine.high %v1457, %v1457
    %v1466 = vcombine.high %v1464, %v1464
    %1471 = vmatprep.subr.mxu0 %v55
    %1472 = vmatpush1.msra.mxu0 %v54
    %1473 = vmatprep.subr.mxu0 %v59
    %1474 = vmatpush1.msra.mxu0 %v58
    %1475 = vmatprep.subr.mxu0 %v63
    %1476 = vmatpush1.msra.mxu0 %v62
    %1477 = vmatprep.subr.mxu0 %v67
    %1478 = vmatpush1.msra.mxu0 %v66
    %1479 = vmatprep.subr.mxu0 %v71
    %1480 = vmatpush1.msra.mxu0 %v70
    %1481 = vmatprep.subr.mxu0 %v75
    %1482 = vmatpush1.msra.mxu0 %v74
    %1483 = vmatprep.subr.mxu0 %v79
    %1484 = vmatpush1.msra.mxu0 %v78
    %1485 = vmatprep.subr.mxu0 %v83
    %1486 = vmatpush1.msra.mxu0 %v82
    %1487 = vmatprep.subr.mxu0 %v87
    %1488 = vmatpush1.msra.mxu0 %v86
    %1489 = vmatprep.subr.mxu0 %v91
    %1490 = vmatpush1.msra.mxu0 %v90
    %1491 = vmatprep.subr.mxu0 %v95
    %1492 = vmatpush1.msra.mxu0 %v94
    %1493 = vmatprep.subr.mxu0 %v99
    %1494 = vmatpush1.msra.mxu0 %v98
    %1495 = vmatprep.subr.mxu0 %v103
    %1496 = vmatpush1.msra.mxu0 %v102
    %1497 = vmatprep.subr.mxu0 %v107
    %1498 = vmatpush1.msra.mxu0 %v106
    %1499 = vmatprep.subr.mxu0 %v111
    %1500 = vmatpush1.msra.mxu0 %v110
    %1501 = vmatprep.subr.mxu0 %v115
    %1502 = vmatpush1.msra.mxu0 %v114
    %1503 = vmatprep.subr.mxu0 0.0
    %1504 = vmatpush1.msra.mxu0 0.0
    %1505 = vmatprep.subr.mxu0 0.0
    %1506 = vmatpush1.msra.mxu0 0.0
    %1507 = vmatprep.subr.mxu0 0.0
    %1508 = vmatpush1.msra.mxu0 0.0
    %1509 = vmatprep.subr.mxu0 0.0
    %1510 = vmatpush1.msra.mxu0 0.0
    %1511 = vmatprep.subr.mxu0 0.0
    %1512 = vmatpush1.msra.mxu0 0.0
    %1513 = vmatprep.subr.mxu0 0.0
    %1514 = vmatpush1.msra.mxu0 0.0
    %1515 = vmatprep.subr.mxu0 0.0
    %1516 = vmatpush1.msra.mxu0 0.0
    %1517 = vmatprep.subr.mxu0 0.0
    %1518 = vmatpush1.msra.mxu0 0.0
    %1519 = vmatprep.subr.mxu0 0.0
    %1520 = vmatpush1.msra.mxu0 0.0
    %1521 = vmatprep.subr.mxu0 0.0
    %1522 = vmatpush1.msra.mxu0 0.0
    %1523 = vmatprep.subr.mxu0 0.0
    %1524 = vmatpush1.msra.mxu0 0.0
    %1525 = vmatprep.subr.mxu0 0.0
    %1526 = vmatpush1.msra.mxu0 0.0
    %1527 = vmatprep.subr.mxu0 0.0
    %1528 = vmatpush1.msra.mxu0 0.0
    %1529 = vmatprep.subr.mxu0 0.0
    %1530 = vmatpush1.msra.mxu0 0.0
    %1531 = vmatprep.subr.mxu0 0.0
    %1532 = vmatpush1.msra.mxu0 0.0
    %1533 = vmatprep.subr.mxu0 0.0
    %1534 = vmatpush1.msra.mxu0 0.0
    %1535 = vmatprep.mubr.f32.mxu0 0.0
    %1536 = vmatmul.mubr.f32.gmra.mrb[0].mxu0 %v1446
    %v1537 = vpop.f32.mrb[0].mxu0
    %v1538 = vadd.f32 %v1457, %v1537
    %v1539 = vpop.f32.mrb[0].mxu0
    %v1540 = vadd.f32 %v1465, %v1539
    %1541 = vdwg.mxu0
    %1542 = vmatprep.subr.mxu0 %v57
    %1543 = vmatpush1.msra.mxu0 %v56
    %1544 = vmatprep.subr.mxu0 %v61
    %1545 = vmatpush1.msra.mxu0 %v60
    %1546 = vmatprep.subr.mxu0 %v65
    %1547 = vmatpush1.msra.mxu0 %v64
    %1548 = vmatprep.subr.mxu0 %v69
    %1549 = vmatpush1.msra.mxu0 %v68
    %1550 = vmatprep.subr.mxu0 %v73
    %1551 = vmatpush1.msra.mxu0 %v72
    %1552 = vmatprep.subr.mxu0 %v77
    %1553 = vmatpush1.msra.mxu0 %v76
    %1554 = vmatprep.subr.mxu0 %v81
    %1555 = vmatpush1.msra.mxu0 %v80
    %1556 = vmatprep.subr.mxu0 %v85
    %1557 = vmatpush1.msra.mxu0 %v84
    %1558 = vmatprep.subr.mxu0 %v89
    %1559 = vmatpush1.msra.mxu0 %v88
    %1560 = vmatprep.subr.mxu0 %v93
    %1561 = vmatpush1.msra.mxu0 %v92
    %1562 = vmatprep.subr.mxu0 %v97
    %1563 = vmatpush1.msra.mxu0 %v96
    %1564 = vmatprep.subr.mxu0 %v101
    %1565 = vmatpush1.msra.mxu0 %v100
    %1566 = vmatprep.subr.mxu0 %v105
    %1567 = vmatpush1.msra.mxu0 %v104
    %1568 = vmatprep.subr.mxu0 %v109
    %1569 = vmatpush1.msra.mxu0 %v108
    %1570 = vmatprep.subr.mxu0 %v113
    %1571 = vmatpush1.msra.mxu0 %v112
    %1572 = vmatprep.subr.mxu0 %v117
    %1573 = vmatpush1.msra.mxu0 %v116
    %1574 = vmatprep.subr.mxu0 0.0
    %1575 = vmatpush1.msra.mxu0 0.0
    %1576 = vmatprep.subr.mxu0 0.0
    %1577 = vmatpush1.msra.mxu0 0.0
    %1578 = vmatprep.subr.mxu0 0.0
    %1579 = vmatpush1.msra.mxu0 0.0
    %1580 = vmatprep.subr.mxu0 0.0
    %1581 = vmatpush1.msra.mxu0 0.0
    %1582 = vmatprep.subr.mxu0 0.0
    %1583 = vmatpush1.msra.mxu0 0.0
    %1584 = vmatprep.subr.mxu0 0.0
    %1585 = vmatpush1.msra.mxu0 0.0
    %1586 = vmatprep.subr.mxu0 0.0
    %1587 = vmatpush1.msra.mxu0 0.0
    %1588 = vmatprep.subr.mxu0 0.0
    %1589 = vmatpush1.msra.mxu0 0.0
    %1590 = vmatprep.subr.mxu0 0.0
    %1591 = vmatpush1.msra.mxu0 0.0
    %1592 = vmatprep.subr.mxu0 0.0
    %1593 = vmatpush1.msra.mxu0 0.0
    %1594 = vmatprep.subr.mxu0 0.0
    %1595 = vmatpush1.msra.mxu0 0.0
    %1596 = vmatprep.subr.mxu0 0.0
    %1597 = vmatpush1.msra.mxu0 0.0
    %1598 = vmatprep.subr.mxu0 0.0
    %1599 = vmatpush1.msra.mxu0 0.0
    %1600 = vmatprep.subr.mxu0 0.0
    %1601 = vmatpush1.msra.mxu0 0.0
    %1602 = vmatprep.subr.mxu0 0.0
    %1603 = vmatpush1.msra.mxu0 0.0
    %1604 = vmatprep.subr.mxu0 0.0
    %1605 = vmatpush1.msra.mxu0 0.0
    %1606 = vmatprep.mubr.f32.mxu0 0.0
    %1607 = vmatmul.mubr.f32.gmra.mrb[0].mxu0 %v1446
    %v1608 = vpop.f32.mrb[0].mxu0
    %v1609 = vadd.f32 %v1464, %v1608
    %v1610 = vpop.f32.mrb[0].mxu0
    %v1611 = vadd.f32 %v1466, %v1610
    %1612 = vdwg.mxu0
    %v1613 = vxor.u32 %v1538, 2147483648
    %v1614 = vmul.f32 %v1613, 1.442695
    %v1615 = vpow.pop %v1614
    %v1616 = vadd.f32 %v1615, 1.0
    %v1617 = vrcp.pop %v1616
    %v1618 = vmul.f32 1.0, %v1617
    %v1619 = vxor.u32 %v1540, 2147483648
    %v1620 = vmul.f32 %v1619, 1.442695
    %v1621 = vpow.pop %v1620
    %v1622 = vadd.f32 %v1621, 1.0
    %v1623 = vrcp.pop %v1622
    %v1624 = vmul.f32 1.0, %v1623
    %v1625 = vtanh.pop %v1609
    %v1626 = vxor.u32 %v1611, 2147483648
    %v1627 = vmul.f32 %v1626, 1.442695
    %v1628 = vpow.pop %v1627
    %v1629 = vadd.f32 %v1628, 1.0
    %v1630 = vrcp.pop %v1629
    %v1631 = vmul.f32 1.0, %v1630
    %v1632 = vmul.f32 %v1624, %v1444
    %v1633 = vmul.f32 %v1618, %v1625
    %v1634 = vadd.f32 %v1632, %v1633
    %v1635 = vtanh.pop %v1634
    %v1636 = vmul.f32 %v1631, %v1635
    %1637 = vst [vmem:[#allocation2] sm:$0x3] %v1636
    %1638 = vst [vmem:[#allocation3] sm:$0x3] %v1634
    // Predicated region
    $region30: #{tpu_custom_call.1} parent=1 // pred_check
      %p1639 = pneg %p46
    $region31: #{tpu_custom_call.1} parent=1 // pred_check_branch
      %1641 = sbr.rel (%p1639) target = $region33
    $region32: #{tpu_custom_call.1} parent=1 // pred_region
      %v1642 = vld [vmem:[%s2] sm:$0x1]
      %v1644 = vlaneseq
      %v1645 = vshrl.u32 %v1644, 7
      %v1646 = vsub.s32 0, %v1645
      %v1647 = vrot.slane %v1642, %v1646
      %v1649 = vmul.f32 %v1636, %v1647
      %vm1650 = vcmask 1041408
      %v1651 = vsel %vm1650, %v1649, 0.0
      %1652 = vadd.xlane.f32.xlu0 %v1651
      %v1653 = vpop.xlane.xlu0 %1652
      %s1654 = sld [smem:[#allocation4]]
      %v1655 = vstv %s1654
      %v1656 = vadd.f32 %v1653, %v1655
      %vm1657 = vcmask 1024
      %1658 = vst.msk [vmem:[%s4] sm:$0x3] %vm1657, %v1656
    $region33: #{tpu_custom_call.1} parent=1 // pred_fallthru
      _
    // Predicated region
    $region34: #{tpu_custom_call.1} parent=1 // pred_check
      _
    $region35: #{tpu_custom_call.1} parent=1 // pred_check_branch
      %1660 = sbr.rel (0) target = $region37
    $region36: #{tpu_custom_call.1} parent=1 // pred_region
      _
    $region37: #{tpu_custom_call.1} parent=1 // pred_fallthru
      _
    // Predicated region
    $region38: #{tpu_custom_call.1} parent=1 // pred_check
      _
    $region39: #{tpu_custom_call.1} parent=1 // pred_check_branch
      %1662 = sbr.rel (0) target = $region41
    $region40: #{tpu_custom_call.1} parent=1 // pred_region
      _
    $region41: #{tpu_custom_call.1} parent=1 // pred_fallthru
      _
    %1663 = vsyncpa [#allocation6], 1
    %1664 = vsyncpa [#allocation8], 1

</llo_original>
